<compile_context>
chip_gen: v5e
topology: v5e:2x2
jax: 0.10.0
libtpu: 0.0.40
codegen_flags: <defaults>
</compile_context>

<pallas_src>
import jax
import jax.numpy as jnp
from jax.experimental import pallas as pl
from jax.experimental.pallas import tpu as pltpu


def _ceil_to(v, m):
    return ((v + m - 1) // m) * m


# ----------------------------------------------------------------------------
# Fused, batched SPELLA forward
# ----------------------------------------------------------------------------
def spella_forward_fused(gfeat, gneg, packed, n):
    """gfeat: (B, 2n, d_pad) f32  [rows 0:n = x (zero-padded), rows n:2n = [A_f|A_b|A_a] mean-norm]
       gneg : (B, n*n, 4)   f32  [lanes 0..2 = {0,-1e30} per-branch source mask, flat (i,j)]"""
    B = gfeat.shape[0]
    c0, cp = packed["c0"], packed["cp"]
    d_pad, final_dim = packed["d_pad"], packed["final_dim"]
    vec, wwide, w96 = packed["vec"], packed["wwide"], packed["w96"]

    def kernel(gfeat_ref, gneg_ref, vec_ref, wwide_ref, w96_ref, o_ref):
        f32, bf16 = jnp.float32, jnp.bfloat16

        # ---- resident constant slabs (fetched once across the batch grid) ----
        v = vec_ref[...]                          # (16, 96) f32
        b_in = v[0:1, 0:c0]                       # input Linear bias (BN01 folded)
        b1p = v[1:2, :]                           # EdgeConv Lin1 bias (3 branches lane-packed)
        b2p = v[2:3, :]                           # EdgeConv Lin2 bias (applied after max)
        s1p = v[3:4, :]                           # BN1x scale
        t1p = v[4:5, :]                           # BN1x shift
        b21p = v[5:6, :]                          # SAGE21 bias (BN21 folded)
        b3s = v[6:7, 0:final_dim]                 # summed SAGE3x biases
        lm0, lm1, lm2 = v[8:9, :], v[9:10, :], v[10:11, :]   # branch lane-group masks {0,1}

        ww = wwide_ref[...]                       # (d_pad+c0, 256) bf16
        w_in = ww[0:d_pad, 0:c0]                  # (48, 32)  zero-padded input Linear (BN folded)
        w_ab = ww[d_pad:d_pad + c0, :]            # (32, 256) [wA | pad | wB | pad]

        wb = w96_ref[...]                         # (5*96, 96) bf16
        w2p = wb[0:cp, :]                         # (96, 96)  block-diag EdgeConv Lin2
        w21 = wb[cp:3 * cp, :]                    # (192, 96) [wl21p ; wr21p] (BN21 folded)
        w3 = wb[3 * cp:5 * cp, 0:final_dim]       # (192, 16) [wl3 stacked ; wr3 stacked]

        # ---- per-graph operands ----
        gf = gfeat_ref[...][0]                    # (2n, d_pad) f32
        x = gf[0:n, :]                            # (16, 48) zero-padded input features
        adjcat_bf = gf[n:2 * n, 0:3 * n].astype(bf16)   # (16, 48) [A_f|A_b|A_a] mean-normalized
        negr = gneg_ref[...][0]                   # (256, 4)  {0,-1e30} per branch

        # ---- input stage: fused Linear011+Linear013, BN01 folded, ReLU ----
        h0 = jnp.dot(x.astype(bf16), w_in, preferred_element_type=f32) + b_in
        h0 = jnp.maximum(h0, 0.0)                                          # (16, 32)

        # ---- EdgeConv Lin1 (target & source parts in one dot), 3 branches lane-packed ----
        ab = jnp.dot(h0.astype(bf16), w_ab, preferred_element_type=f32)    # (16, 256)
        a = ab[:, 0:cp]                                                    # target part
        bsrc = ab[:, 128:128 + cp]                                         # source part
        hpre = jnp.maximum(a[:, None, :] + bsrc[None, :, :] + b1p, 0.0)    # (16, 16, 96)

        # ---- EdgeConv Lin2 (block-diagonal) + masked max over sources ----
        msg = jnp.dot(hpre.reshape(n * n, cp).astype(bf16), w2p,
                      preferred_element_type=f32)                          # (256, 96)
        negexp = (negr[:, 0:1] * lm0 + negr[:, 1:2] * lm1 + negr[:, 2:3] * lm2)  # (256, 96)
        agg = jnp.max((msg + negexp).reshape(n, n, cp), axis=1)            # (16, 96)
        # nodes with no in-neighbors: max is ~-1e30 -> zero them (replaces shipped degree mask)
        agg = jnp.where(agg > -1e20, agg + b2p, 0.0)
        h1 = jnp.maximum(agg * s1p + t1p, 0.0)                             # BN1x + ReLU

        # ---- fused per-branch mean aggregation: [A_f|A_b|A_a] @ [m0*h ; m1*h ; m2*h] ----
        def mean_agg(h):
            hs = jnp.concatenate([h * lm0, h * lm1, h * lm2], axis=0).astype(bf16)  # (48, 96)
            return jnp.dot(adjcat_bf, hs, preferred_element_type=f32)               # (16, 96)

        # ---- shared SAGEConv layer21 (block-diag, BN21 folded) + ReLU : one dot ----
        h2 = jnp.dot(jnp.concatenate([mean_agg(h1), h1], axis=1).astype(bf16), w21,
                     preferred_element_type=f32) + b21p
        h2 = jnp.maximum(h2, 0.0)                                          # (16, 96)

        # ---- per-branch SAGEConv layer3x + branch sum folded into stacked weights ----
        out = jnp.dot(jnp.concatenate([mean_agg(h2), h2], axis=1).astype(bf16), w3,
                      preferred_element_type=f32) + b3s                    # (16, 16)
        o_ref[...] = out[None]

    return pl.pallas_call(
        kernel,
        out_shape=jax.ShapeDtypeStruct((B, n, final_dim), jnp.float32),
        grid=(B,),
        in_specs=[
            pl.BlockSpec((1, 2 * n, d_pad), lambda b: (b, 0, 0)),     # per-graph features+adj
            pl.BlockSpec((1, n * n, 4), lambda b: (b, 0, 0)),         # per-graph neg masks
            pl.BlockSpec(vec.shape, lambda b: (0, 0)),                # resident bias/BN/mask slab
            pl.BlockSpec(wwide.shape, lambda b: (0, 0)),              # resident bf16 weights (wide)
            pl.BlockSpec(w96.shape, lambda b: (0, 0)),                # resident bf16 weights (96-lane)
        ],
        out_specs=pl.BlockSpec((1, n, final_dim), lambda b: (b, 0, 0)),
        compiler_params=pltpu.CompilerParams(dimension_semantics=("parallel",)),
    )(gfeat, gneg, vec, wwide, w96)


# ----------------------------------------------------------------------------
# Trace-time packing (BN folding, branch lane-packing, bf16 weight slabs)
# ----------------------------------------------------------------------------
def pack_spella_params(params, n):
    assert params["num_modality"] == 1, "fused input matmul assumes num_modality == 1"
    c0 = params["lin011"][0].shape[1]
    c1 = params["sage21"][0].shape[1]
    assert c1 == c0, "lane-packed block-diagonal layer21 assumes channel1 == channel2"
    cp = 3 * c0
    d_in = params["lin011"][0].shape[0] + params["lin013"][0].shape[0]
    final_dim = params["sage31"][0].shape[1]
    assert params["sage31"][0].shape[0] == c1
    d_pad = max(_ceil_to(d_in, 16), 3 * n)       # zero-padded K for the input dot / gfeat width

    w011, b011 = params["lin011"]
    w013, b013 = params["lin013"]
    s01, t01 = params["bn01"]
    w_in = jnp.concatenate([w011, w013], axis=0) * s01           # (40, 32), BN01 folded
    b_in = (b011 + b013) * s01 + t01                             # (1, 32)

    ecs = [params["ec11"], params["ec12"], params["ec13"]]       # (w1i, w1d, b1, w2, b2)
    bns = [params["bn11"], params["bn12"], params["bn13"]]
    wA = jnp.concatenate([w1i - w1d for (w1i, w1d, _, _, _) in ecs], axis=1)   # (32, 96)
    wB = jnp.concatenate([w1d for (_, w1d, _, _, _) in ecs], axis=1)           # (32, 96)
    b1p = jnp.concatenate([b1 for (_, _, b1, _, _) in ecs], axis=1)            # (1, 96)
    b2p = jnp.concatenate([b2 for (_, _, _, _, b2) in ecs], axis=1)            # (1, 96)
    w2p = jax.scipy.linalg.block_diag(*[w2 for (_, _, _, w2, _) in ecs])       # (96, 96)
    s1p = jnp.concatenate([s for (s, _) in bns], axis=1)
    t1p = jnp.concatenate([t for (_, t) in bns], axis=1)

    wl21, bl21, wr21 = params["sage21"]
    s21, t21 = params["bn21"]
    wl21f, wr21f = wl21 * s21, wr21 * s21                        # BN21 folded (exact, eval mode)
    b21 = bl21 * s21 + t21
    wl21p = jax.scipy.linalg.block_diag(wl21f, wl21f, wl21f)     # (96, 96) shared layer21
    wr21p = jax.scipy.linalg.block_diag(wr21f, wr21f, wr21f)
    b21p = jnp.tile(b21, (1, 3))

    sages3 = [params["sage31"], params["sage32"], params["sage33"]]
    wl3s = jnp.concatenate([wl for (wl, _, _) in sages3], axis=0)    # (96, 16), branch sum folded
    wr3s = jnp.concatenate([wr for (_, _, wr) in sages3], axis=0)    # (96, 16)
    b3s = sages3[0][1] + sages3[1][1] + sages3[2][1]                 # (1, 16)

    # ---- bf16 MXU weight slabs (2 DMAs, resident across the batch grid) ----
    wwide = jnp.zeros((d_pad + c0, 256), jnp.float32)
    wwide = wwide.at[0:d_in, 0:c0].set(w_in)                     # rows d_in:d_pad stay zero
    wwide = wwide.at[d_pad:d_pad + c0, 0:cp].set(wA)             # target part at lane 0
    wwide = wwide.at[d_pad:d_pad + c0, 128:128 + cp].set(wB)     # source part at lane 128
    wwide = wwide.astype(jnp.bfloat16)

    w96 = jnp.zeros((5 * cp, cp), jnp.float32)
    w96 = w96.at[0:cp, :].set(w2p)
    w96 = w96.at[cp:2 * cp, :].set(wl21p)
    w96 = w96.at[2 * cp:3 * cp, :].set(wr21p)
    w96 = w96.at[3 * cp:4 * cp, 0:final_dim].set(wl3s)
    w96 = w96.at[4 * cp:5 * cp, 0:final_dim].set(wr3s)
    w96 = w96.astype(jnp.bfloat16)

    # ---- f32 bias / BN / lane-group-mask slab ----
    lanemasks = jnp.repeat(jnp.eye(3, dtype=jnp.float32), c0, axis=1)   # (3, 96)
    vec = jnp.zeros((16, cp), jnp.float32)
    vec = (vec.at[0, 0:c0].set(b_in[0])
              .at[1].set(b1p[0]).at[2].set(b2p[0])
              .at[3].set(s1p[0]).at[4].set(t1p[0])
              .at[5].set(b21p[0])
              .at[6, 0:final_dim].set(b3s[0])
              .at[8].set(lanemasks[0]).at[9].set(lanemasks[1]).at[10].set(lanemasks[2]))

    return dict(vec=vec, wwide=wwide, w96=w96, c0=c0, cp=cp,
                d_in=d_in, d_pad=d_pad, final_dim=final_dim)


# ----------------------------------------------------------------------------
# Graph-operand packing (host side, per graph)
# ----------------------------------------------------------------------------
def dense_adjs(edge_index, edge_attr, n):
    src, tgt = edge_index[0], edge_index[1]

    def adj(mask):
        a = jnp.zeros((n, n), jnp.float32)
        return a.at[tgt, src].max(mask.astype(jnp.float32))      # (target, source)

    return (adj(edge_attr <= 0), adj(edge_attr >= 0),
            adj(jnp.ones_like(edge_attr, dtype=bool)))


def mean_norm(a):
    return a / jnp.maximum(a.sum(axis=1, keepdims=True), 1.0)


def pack_graph_inputs(graphs, n, packed):
    d_pad, d_in = packed["d_pad"], packed["d_in"]
    assert d_pad >= 3 * n and d_pad >= d_in
    gfeats, gnegs = [], []
    for (x, ei, ea) in graphs:
        adjs = dense_adjs(ei, ea, n)
        adjcat = jnp.concatenate([mean_norm(a) for a in adjs], axis=1)           # (n, 3n)
        neg = jnp.stack([jnp.where(a > 0.0, 0.0, -1e30) for a in adjs], axis=-1)  # (n, n, 3)
        negflat = jnp.pad(neg.reshape(n * n, 3), ((0, 0), (0, 1)))               # (n*n, 4)
        feat = jnp.zeros((2 * n, d_pad), jnp.float32)
        feat = feat.at[0:n, 0:d_in].set(x)
        feat = feat.at[n:2 * n, 0:3 * n].set(adjcat)
        gfeats.append(feat)
        gnegs.append(negflat)
    return jnp.stack(gfeats), jnp.stack(gnegs)


# ----------------------------------------------------------------------------
# Pure-JAX f32 reference (unpacked, branch-by-branch)
# ----------------------------------------------------------------------------
def ref_input(xv, xc, w011, b011, w013, b013, scale, shift):
    h = xv @ w011 + b011 + xc @ w013 + b013
    return jax.nn.relu(h * scale + shift)


def ref_edgeconv(x, adj, w1i, w1d, b1, w2, b2, scale, shift):
    a = x @ (w1i - w1d)
    b = x @ w1d
    h = jax.nn.relu(a[:, None, :] + b[None, :, :] + b1[None, :, :])
    msg = h @ w2 + b2
    masked = jnp.where(adj[:, :, None] > 0.0, msg, -1e30)
    agg = masked.max(axis=1)
    agg = jnp.where(adj.sum(1, keepdims=True) > 0.0, agg, 0.0)
    return jax.nn.relu(agg * scale + shift)


def ref_sage(x, adjm, wl, bl, wr, scale=None, shift=None, bn_relu=False):
    out = (adjm @ x) @ wl + bl + x @ wr
    if bn_relu:
        out = jax.nn.relu(out * scale + shift)
    return out


def spella_forward_ref(x, edge_index, edge_attr, params):
    n = x.shape[0]
    pre = params["pre_computed_features"]
    fdim = x.shape[1] - pre
    fv = fdim // params["num_modality"]
    adjs = dense_adjs(edge_index, edge_attr, n)
    adjm = [mean_norm(a) for a in adjs]
    h0 = ref_input(x[:, :fv], x[:, fdim:], *params["lin011"], *params["lin013"],
                   *params["bn01"])
    ecs = [params["ec11"], params["ec12"], params["ec13"]]
    bns = [params["bn11"], params["bn12"], params["bn13"]]
    sages3 = [params["sage31"], params["sage32"], params["sage33"]]
    out = None
    for k in range(3):
        h = ref_edgeconv(h0, adjs[k], *ecs[k], *bns[k])
        h = ref_sage(h, adjm[k], *params["sage21"], *params["bn21"], True)
        o = ref_sage(h, adjm[k], *sages3[k])
        out = o if out is None else out + o
    return out


# ----------------------------------------------------------------------------
# Deterministic synthetic parameters / graphs
# ----------------------------------------------------------------------------
def linear_params(key, cin, cout, std=0.1):
    kw, kb = jax.random.split(key)
    return (std * jax.random.normal(kw, (cin, cout), jnp.float32),
            std * jax.random.normal(kb, (1, cout), jnp.float32))


def bn_params(key, c, eps=1e-5):
    kg, kb = jax.random.split(key)
    gamma = 1.0 + 0.1 * jax.random.normal(kg, (1, c), jnp.float32)
    beta = 0.1 * jax.random.normal(kb, (1, c), jnp.float32)
    running_mean = jnp.zeros((1, c), jnp.float32)
    running_var = jnp.ones((1, c), jnp.float32)
    scale = gamma / jnp.sqrt(running_var + eps)
    shift = beta - running_mean * scale
    return scale, shift


def edgeconv_params(key, c):
    k1, k2, k3 = jax.random.split(key, 3)
    w1i, _ = linear_params(k1, c, c)     # acts on x_i
    w1d, b1 = linear_params(k2, c, c)    # acts on (x_j - x_i); b1 is Lin1 bias
    w2, b2 = linear_params(k3, c, c)
    return w1i, w1d, b1, w2, b2


def sage_params(key, cin, cout):
    k1, k2 = jax.random.split(key)
    wl, bl = linear_params(k1, cin, cout)                        # lin_l (neighbors, bias)
    wr = 0.1 * jax.random.normal(k2, (cin, cout), jnp.float32)   # lin_r (root, no bias)
    return wl, bl, wr


def temporal_graph(n, window, self_loops=True):
    src, tgt, attr = [], [], []
    for i in range(n):
        if self_loops:
            src.append(i); tgt.append(i); attr.append(0.0)
        for k in range(1, window + 1):
            if i - k >= 0:
                src.append(i - k); tgt.append(i); attr.append(-float(k))
                src.append(i); tgt.append(i - k); attr.append(float(k))
    return (jnp.array([src, tgt], dtype=jnp.int32),
            jnp.array(attr, dtype=jnp.float32))


if __name__ == "__main__":
    N, D, C0, C1, FINAL, PRE, B = 16, 40, 32, 32, 16, 8, 4

    key = jax.random.PRNGKey(0)
    keys = jax.random.split(key, 24)

    params = {
        "num_modality": 1,
        "pre_computed_features": PRE,
        "final_dim": FINAL,
        "lin011": linear_params(keys[1], D - PRE, C0),
        "lin013": linear_params(keys[2], PRE, C0),
        "bn01": bn_params(keys[3], C0),
        "ec11": edgeconv_params(keys[4], C0),
        "ec12": edgeconv_params(keys[5], C0),
        "ec13": edgeconv_params(keys[6], C0),
        "bn11": bn_params(keys[7], C0),
        "bn12": bn_params(keys[8], C0),
        "bn13": bn_params(keys[9], C0),
        "sage21": sage_params(keys[10], C0, C1),
        "bn21": bn_params(keys[11], C1),
        "sage31": sage_params(keys[12], C1, FINAL),
        "sage32": sage_params(keys[13], C1, FINAL),
        "sage33": sage_params(keys[14], C1, FINAL),
    }

    packed = pack_spella_params(params, N)

    # Batch of graphs with varying temporal structure; graph 3 has no self-loops so some nodes
    # are isolated in the forward/backward branches (exercises the zero-degree path).
    graphs = []
    for b in range(B):
        x = jax.random.normal(keys[15 + b], (N, D), jnp.float32)
        ei, ea = temporal_graph(N, window=1 + (b % 2), self_loops=(b != 3))
        graphs.append((x, ei, ea))

    gfeat, gneg = pack_graph_inputs(graphs, N, packed)
    out = spella_forward_fused(gfeat, gneg, packed, N)
    out = jax.block_until_ready(out)
    assert out.shape == (B, N, FINAL)

    # bf16 matmul operands -> compare against the f32 reference with bf16-appropriate tolerance.
    for b, (x, ei, ea) in enumerate(graphs):
        ref = jax.block_until_ready(spella_forward_ref(x, ei, ea, params))
        assert jnp.allclose(out[b], ref, rtol=5e-2, atol=5e-2), f"mismatch on graph {b}"

    print("KERNEL_OK")
</pallas_src>

<mosaic_0001>
module attributes {stable_mosaic.version = 11 : i64} {
  func.func @kernel(%arg0: i32, %arg1: memref<1x32x48xf32, #tpu.memory_space<vmem>>, %arg2: memref<1x256x4xf32, #tpu.memory_space<vmem>>, %arg3: memref<16x96xf32, #tpu.memory_space<vmem>>, %arg4: memref<80x256xbf16, #tpu.memory_space<vmem>>, %arg5: memref<480x96xbf16, #tpu.memory_space<vmem>>, %arg6: memref<1x16x16xf32, #tpu.memory_space<vmem>>) attributes {dimension_semantics = [#tpu.dimension_semantics<parallel>], iteration_bounds = array<i64: 4>, scalar_prefetch = 0 : i64, scratch_operands = 0 : i64, tpu.core_type = #tpu.core_type<tc>, window_params = [{transform_indices = @transform_0, window_bounds = array<i64: 1, 32, 48>}, {transform_indices = @transform_1, window_bounds = array<i64: 1, 256, 4>}, {pipeline_mode = #tpu.pipeline_mode<synchronous>, transform_indices = @transform_2, window_bounds = array<i64: 16, 96>}, {pipeline_mode = #tpu.pipeline_mode<synchronous>, transform_indices = @transform_3, window_bounds = array<i64: 80, 256>}, {pipeline_mode = #tpu.pipeline_mode<synchronous>, transform_indices = @transform_4, window_bounds = array<i64: 480, 96>}, {transform_indices = @transform_5, window_bounds = array<i64: 1, 16, 16>}]} {
    %c0 = arith.constant 0 : index
    %c0_0 = arith.constant 0 : index
    %0 = vector.load %arg3[%c0, %c0_0] : memref<16x96xf32, #tpu.memory_space<vmem>>, vector<16x96xf32>
    %1 = vector.extract_strided_slice %0 {offsets = [0, 0], sizes = [1, 32], strides = [1, 1]} : vector<16x96xf32> to vector<1x32xf32>
    %2 = vector.extract_strided_slice %0 {offsets = [1, 0], sizes = [1, 96], strides = [1, 1]} : vector<16x96xf32> to vector<1x96xf32>
    %3 = vector.extract_strided_slice %0 {offsets = [2, 0], sizes = [1, 96], strides = [1, 1]} : vector<16x96xf32> to vector<1x96xf32>
    %4 = vector.extract_strided_slice %0 {offsets = [3, 0], sizes = [1, 96], strides = [1, 1]} : vector<16x96xf32> to vector<1x96xf32>
    %5 = vector.extract_strided_slice %0 {offsets = [4, 0], sizes = [1, 96], strides = [1, 1]} : vector<16x96xf32> to vector<1x96xf32>
    %6 = vector.extract_strided_slice %0 {offsets = [5, 0], sizes = [1, 96], strides = [1, 1]} : vector<16x96xf32> to vector<1x96xf32>
    %7 = vector.extract_strided_slice %0 {offsets = [6, 0], sizes = [1, 16], strides = [1, 1]} : vector<16x96xf32> to vector<1x16xf32>
    %8 = vector.extract_strided_slice %0 {offsets = [8, 0], sizes = [1, 96], strides = [1, 1]} : vector<16x96xf32> to vector<1x96xf32>
    %9 = vector.extract_strided_slice %0 {offsets = [9, 0], sizes = [1, 96], strides = [1, 1]} : vector<16x96xf32> to vector<1x96xf32>
    %10 = vector.extract_strided_slice %0 {offsets = [10, 0], sizes = [1, 96], strides = [1, 1]} : vector<16x96xf32> to vector<1x96xf32>
    %c0_1 = arith.constant 0 : index
    %c0_2 = arith.constant 0 : index
    %11 = vector.load %arg4[%c0_1, %c0_2] : memref<80x256xbf16, #tpu.memory_space<vmem>>, vector<80x256xbf16>
    %12 = vector.extract_strided_slice %11 {offsets = [0, 0], sizes = [48, 32], strides = [1, 1]} : vector<80x256xbf16> to vector<48x32xbf16>
    %13 = vector.extract_strided_slice %11 {offsets = [48, 0], sizes = [32, 256], strides = [1, 1]} : vector<80x256xbf16> to vector<32x256xbf16>
    %c0_3 = arith.constant 0 : index
    %c0_4 = arith.constant 0 : index
    %14 = vector.load %arg5[%c0_3, %c0_4] : memref<480x96xbf16, #tpu.memory_space<vmem>>, vector<480x96xbf16>
    %15 = vector.extract_strided_slice %14 {offsets = [0, 0], sizes = [96, 96], strides = [1, 1]} : vector<480x96xbf16> to vector<96x96xbf16>
    %16 = vector.extract_strided_slice %14 {offsets = [96, 0], sizes = [192, 96], strides = [1, 1]} : vector<480x96xbf16> to vector<192x96xbf16>
    %17 = vector.extract_strided_slice %14 {offsets = [288, 0], sizes = [192, 16], strides = [1, 1]} : vector<480x96xbf16> to vector<192x16xbf16>
    %c0_5 = arith.constant 0 : index
    %c0_6 = arith.constant 0 : index
    %c0_7 = arith.constant 0 : index
    %18 = vector.load %arg1[%c0_5, %c0_6, %c0_7] : memref<1x32x48xf32, #tpu.memory_space<vmem>>, vector<1x32x48xf32>
    %19 = vector.shape_cast %18 : vector<1x32x48xf32> to vector<32x48xf32>
    %20 = vector.extract_strided_slice %19 {offsets = [0, 0], sizes = [16, 48], strides = [1, 1]} : vector<32x48xf32> to vector<16x48xf32>
    %21 = vector.extract_strided_slice %19 {offsets = [16, 0], sizes = [16, 48], strides = [1, 1]} : vector<32x48xf32> to vector<16x48xf32>
    %22 = arith.truncf %21 : vector<16x48xf32> to vector<16x48xbf16>
    %c0_8 = arith.constant 0 : index
    %c0_9 = arith.constant 0 : index
    %c0_10 = arith.constant 0 : index
    %23 = vector.load %arg2[%c0_8, %c0_9, %c0_10] : memref<1x256x4xf32, #tpu.memory_space<vmem>>, vector<1x256x4xf32>
    %24 = vector.shape_cast %23 : vector<1x256x4xf32> to vector<256x4xf32>
    %25 = arith.truncf %20 : vector<16x48xf32> to vector<16x48xbf16>
    %cst = arith.constant dense<0.000000e+00> : vector<16x32xf32>
    %26 = tpu.matmul %25, %12, %cst {dimension_numbers = #tpu.dot_dimension_numbers<[1], [0], [0], [1], [0, 0, 1, 1], [], []>} : vector<16x48xbf16>, vector<48x32xbf16>, vector<16x32xf32> -> vector<16x32xf32>
    %27 = vector.broadcast %1 : vector<1x32xf32> to vector<16x32xf32>
    %28 = arith.addf %26, %27 : vector<16x32xf32>
    %cst_11 = arith.constant 0.000000e+00 : f32
    %29 = vector.broadcast %cst_11 : f32 to vector<16x32xf32>
    %30 = arith.maximumf %28, %29 : vector<16x32xf32>
    %31 = arith.truncf %30 : vector<16x32xf32> to vector<16x32xbf16>
    %cst_12 = arith.constant dense<0.000000e+00> : vector<16x256xf32>
    %32 = tpu.matmul %31, %13, %cst_12 {dimension_numbers = #tpu.dot_dimension_numbers<[1], [0], [0], [1], [0, 0, 1, 1], [], []>} : vector<16x32xbf16>, vector<32x256xbf16>, vector<16x256xf32> -> vector<16x256xf32>
    %33 = vector.extract_strided_slice %32 {offsets = [0, 0], sizes = [16, 96], strides = [1, 1]} : vector<16x256xf32> to vector<16x96xf32>
    %34 = vector.extract_strided_slice %32 {offsets = [0, 128], sizes = [16, 96], strides = [1, 1]} : vector<16x256xf32> to vector<16x96xf32>
    %35 = vector.shape_cast %33 : vector<16x96xf32> to vector<16x1x96xf32>
    %36 = vector.shape_cast %34 : vector<16x96xf32> to vector<1x16x96xf32>
    %37 = vector.broadcast %35 : vector<16x1x96xf32> to vector<16x16x96xf32>
    %38 = vector.broadcast %36 : vector<1x16x96xf32> to vector<16x16x96xf32>
    %39 = arith.addf %37, %38 : vector<16x16x96xf32>
    %40 = vector.shape_cast %2 : vector<1x96xf32> to vector<1x1x96xf32>
    %41 = vector.broadcast %40 : vector<1x1x96xf32> to vector<16x16x96xf32>
    %42 = arith.addf %39, %41 : vector<16x16x96xf32>
    %cst_13 = arith.constant 0.000000e+00 : f32
    %43 = vector.broadcast %cst_13 : f32 to vector<16x16x96xf32>
    %44 = arith.maximumf %42, %43 : vector<16x16x96xf32>
    %45 = vector.shape_cast %44 : vector<16x16x96xf32> to vector<256x96xf32>
    %46 = arith.truncf %45 : vector<256x96xf32> to vector<256x96xbf16>
    %cst_14 = arith.constant dense<0.000000e+00> : vector<256x96xf32>
    %47 = tpu.matmul %46, %15, %cst_14 {dimension_numbers = #tpu.dot_dimension_numbers<[1], [0], [0], [1], [0, 0, 1, 1], [], []>} : vector<256x96xbf16>, vector<96x96xbf16>, vector<256x96xf32> -> vector<256x96xf32>
    %48 = vector.extract_strided_slice %24 {offsets = [0, 0], sizes = [256, 1], strides = [1, 1]} : vector<256x4xf32> to vector<256x1xf32>
    %49 = vector.broadcast %48 : vector<256x1xf32> to vector<256x96xf32>
    %50 = vector.broadcast %8 : vector<1x96xf32> to vector<256x96xf32>
    %51 = arith.mulf %49, %50 : vector<256x96xf32>
    %52 = vector.extract_strided_slice %24 {offsets = [0, 1], sizes = [256, 1], strides = [1, 1]} : vector<256x4xf32> to vector<256x1xf32>
    %53 = vector.broadcast %52 : vector<256x1xf32> to vector<256x96xf32>
    %54 = vector.broadcast %9 : vector<1x96xf32> to vector<256x96xf32>
    %55 = arith.mulf %53, %54 : vector<256x96xf32>
    %56 = arith.addf %51, %55 : vector<256x96xf32>
    %57 = vector.extract_strided_slice %24 {offsets = [0, 2], sizes = [256, 1], strides = [1, 1]} : vector<256x4xf32> to vector<256x1xf32>
    %58 = vector.broadcast %57 : vector<256x1xf32> to vector<256x96xf32>
    %59 = vector.broadcast %10 : vector<1x96xf32> to vector<256x96xf32>
    %60 = arith.mulf %58, %59 : vector<256x96xf32>
    %61 = arith.addf %56, %60 : vector<256x96xf32>
    %62 = arith.addf %47, %61 : vector<256x96xf32>
    %63 = vector.shape_cast %62 : vector<256x96xf32> to vector<16x16x96xf32>
    %cst_15 = arith.constant dense<0xFF800000> : vector<16x96xf32>
    %64 = vector.multi_reduction <maximumf>, %63, %cst_15 [1] : vector<16x16x96xf32> to vector<16x96xf32>
    %cst_16 = arith.constant -1.000000e+20 : f32
    %65 = vector.broadcast %cst_16 : f32 to vector<16x96xf32>
    %66 = arith.cmpf ogt, %64, %65 : vector<16x96xf32>
    %67 = vector.broadcast %3 : vector<1x96xf32> to vector<16x96xf32>
    %68 = arith.addf %64, %67 : vector<16x96xf32>
    %cst_17 = arith.constant 0.000000e+00 : f32
    %69 = vector.broadcast %cst_17 : f32 to vector<16x96xf32>
    %70 = arith.select %66, %68, %69 : vector<16x96xi1>, vector<16x96xf32>
    %71 = vector.broadcast %4 : vector<1x96xf32> to vector<16x96xf32>
    %72 = arith.mulf %70, %71 : vector<16x96xf32>
    %73 = vector.broadcast %5 : vector<1x96xf32> to vector<16x96xf32>
    %74 = arith.addf %72, %73 : vector<16x96xf32>
    %cst_18 = arith.constant 0.000000e+00 : f32
    %75 = vector.broadcast %cst_18 : f32 to vector<16x96xf32>
    %76 = arith.maximumf %74, %75 : vector<16x96xf32>
    %77 = vector.broadcast %8 : vector<1x96xf32> to vector<16x96xf32>
    %78 = arith.mulf %76, %77 : vector<16x96xf32>
    %79 = vector.broadcast %9 : vector<1x96xf32> to vector<16x96xf32>
    %80 = arith.mulf %76, %79 : vector<16x96xf32>
    %81 = vector.broadcast %10 : vector<1x96xf32> to vector<16x96xf32>
    %82 = arith.mulf %76, %81 : vector<16x96xf32>
    %83 = tpu.concatenate %78, %80, %82 in 0 : vector<16x96xf32>, vector<16x96xf32>, vector<16x96xf32> -> vector<48x96xf32>
    %84 = arith.truncf %83 : vector<48x96xf32> to vector<48x96xbf16>
    %cst_19 = arith.constant dense<0.000000e+00> : vector<16x96xf32>
    %85 = tpu.matmul %22, %84, %cst_19 {dimension_numbers = #tpu.dot_dimension_numbers<[1], [0], [0], [1], [0, 0, 1, 1], [], []>} : vector<16x48xbf16>, vector<48x96xbf16>, vector<16x96xf32> -> vector<16x96xf32>
    %86 = tpu.concatenate %85, %76 in 1 : vector<16x96xf32>, vector<16x96xf32> -> vector<16x192xf32>
    %87 = arith.truncf %86 : vector<16x192xf32> to vector<16x192xbf16>
    %cst_20 = arith.constant dense<0.000000e+00> : vector<16x96xf32>
    %88 = tpu.matmul %87, %16, %cst_20 {dimension_numbers = #tpu.dot_dimension_numbers<[1], [0], [0], [1], [0, 0, 1, 1], [], []>} : vector<16x192xbf16>, vector<192x96xbf16>, vector<16x96xf32> -> vector<16x96xf32>
    %89 = vector.broadcast %6 : vector<1x96xf32> to vector<16x96xf32>
    %90 = arith.addf %88, %89 : vector<16x96xf32>
    %cst_21 = arith.constant 0.000000e+00 : f32
    %91 = vector.broadcast %cst_21 : f32 to vector<16x96xf32>
    %92 = arith.maximumf %90, %91 : vector<16x96xf32>
    %93 = vector.broadcast %8 : vector<1x96xf32> to vector<16x96xf32>
    %94 = arith.mulf %92, %93 : vector<16x96xf32>
    %95 = vector.broadcast %9 : vector<1x96xf32> to vector<16x96xf32>
    %96 = arith.mulf %92, %95 : vector<16x96xf32>
    %97 = vector.broadcast %10 : vector<1x96xf32> to vector<16x96xf32>
    %98 = arith.mulf %92, %97 : vector<16x96xf32>
    %99 = tpu.concatenate %94, %96, %98 in 0 : vector<16x96xf32>, vector<16x96xf32>, vector<16x96xf32> -> vector<48x96xf32>
    %100 = arith.truncf %99 : vector<48x96xf32> to vector<48x96xbf16>
    %cst_22 = arith.constant dense<0.000000e+00> : vector<16x96xf32>
    %101 = tpu.matmul %22, %100, %cst_22 {dimension_numbers = #tpu.dot_dimension_numbers<[1], [0], [0], [1], [0, 0, 1, 1], [], []>} : vector<16x48xbf16>, vector<48x96xbf16>, vector<16x96xf32> -> vector<16x96xf32>
    %102 = tpu.concatenate %101, %92 in 1 : vector<16x96xf32>, vector<16x96xf32> -> vector<16x192xf32>
    %103 = arith.truncf %102 : vector<16x192xf32> to vector<16x192xbf16>
    %cst_23 = arith.constant dense<0.000000e+00> : vector<16x16xf32>
    %104 = tpu.matmul %103, %17, %cst_23 {dimension_numbers = #tpu.dot_dimension_numbers<[1], [0], [0], [1], [0, 0, 1, 1], [], []>} : vector<16x192xbf16>, vector<192x16xbf16>, vector<16x16xf32> -> vector<16x16xf32>
    %105 = vector.broadcast %7 : vector<1x16xf32> to vector<16x16xf32>
    %106 = arith.addf %104, %105 : vector<16x16xf32>
    %107 = vector.shape_cast %106 : vector<16x16xf32> to vector<1x16x16xf32>
    %c0_24 = arith.constant 0 : index
    %c0_25 = arith.constant 0 : index
    %c0_26 = arith.constant 0 : index
    %108 = vector.load %arg6[%c0_24, %c0_25, %c0_26] : memref<1x16x16xf32, #tpu.memory_space<vmem>>, vector<1x16x16xf32>
    tpu.vector_store %arg6[%c0_24, %c0_25, %c0_26], %107 {strides = array<i32>} : memref<1x16x16xf32, #tpu.memory_space<vmem>>, vector<1x16x16xf32>,
    return
  }
  func.func @transform_0(%arg0: i32) -> (i32, i32, i32) {
    %c0_i32 = arith.constant 0 : i32
    %c0_i32_0 = arith.constant 0 : i32
    %c0_i32_1 = arith.constant 0 : i32
    return %arg0, %c0_i32, %c0_i32_0 : i32, i32, i32
  }
  func.func @transform_1(%arg0: i32) -> (i32, i32, i32) {
    %c0_i32 = arith.constant 0 : i32
    %c0_i32_0 = arith.constant 0 : i32
    %c0_i32_1 = arith.constant 0 : i32
    return %arg0, %c0_i32, %c0_i32_0 : i32, i32, i32
  }
  func.func @transform_2(%arg0: i32) -> (i32, i32) {
    %c0_i32 = arith.constant 0 : i32
    %c0_i32_0 = arith.constant 0 : i32
    %c0_i32_1 = arith.constant 0 : i32
    return %c0_i32, %c0_i32_0 : i32, i32
  }
  func.func @transform_3(%arg0: i32) -> (i32, i32) {
    %c0_i32 = arith.constant 0 : i32
    %c0_i32_0 = arith.constant 0 : i32
    %c0_i32_1 = arith.constant 0 : i32
    return %c0_i32, %c0_i32_0 : i32, i32
  }
  func.func @transform_4(%arg0: i32) -> (i32, i32) {
    %c0_i32 = arith.constant 0 : i32
    %c0_i32_0 = arith.constant 0 : i32
    %c0_i32_1 = arith.constant 0 : i32
    return %c0_i32, %c0_i32_0 : i32, i32
  }
  func.func @transform_5(%arg0: i32) -> (i32, i32, i32) {
    %c0_i32 = arith.constant 0 : i32
    %c0_i32_0 = arith.constant 0 : i32
    %c0_i32_1 = arith.constant 0 : i32
    return %arg0, %c0_i32, %c0_i32_0 : i32, i32, i32
  }
}

</mosaic_0001>

<llo_original>
// kernel: tpu_custom_call.1
$region0: #{tpu_custom_call.1}
  #allocation0 [shape = 'u32[]', space=smem, size = 0x4, offset = 0x4, fixed_abs, tag = 'smem constant byte address 0x4 - core index']
  #allocation1 [shape = 'u32[72,128]{1,0:T(1,128)}', space=vmem, size = 0x9000, scoped, tag = 'internal scratch']
  %s0 = inlined_call_operand.vmem [shape: f32[4,32,48], index: 0, kind: input, shape index: {}]
  %s1 = inlined_call_operand.vmem [shape: f32[4,256,4], index: 1, kind: input, shape index: {}]
  %s2 = inlined_call_operand.vmem [shape: f32[16,96], index: 2, kind: input, shape index: {}]
  %s3 = inlined_call_operand.vmem [shape: bf16[80,256], index: 3, kind: input, shape index: {}]
  %s4 = inlined_call_operand.vmem [shape: bf16[480,96], index: 4, kind: input, shape index: {}]
  %s5 = inlined_call_operand.hbm [shape: f32[4,16,16], index: 5, kind: output, shape index: {}]
  %s6 = sld [smem:[#allocation0]]
  $region53: #{tpu_custom_call.1} parent=0
    _
  %s8 = ssub.s32 1, %s6
  %s9 = scalar_select 0, %s8, %s6
  $region1: #{tpu_custom_call.1} parent=0
    #allocation2 [shape = 'u8[16384]{0}', space=vmem, size = 0x4000, scoped, tag = 'output window, operand 0']
    #allocation3 [shape = 's32[2]{0}', space=sflag, size = 0x8, scoped, tag = 'scoped memory for tpu_custom_call.1']
    %10 = vsyncpa [#allocation3], 0
    %s11 = scalar_lea.sflag [#allocation3], 1
    %12 = vsyncpa %s11, 0
    loop: start=0, step=1, limit=6
    $region2: #{tpu_custom_call.1} parent=1 // loop_pre_header
      _
    $region3: #{tpu_custom_call.1} parent=1 // loop_header
      %s14 = sphi 0, %s18
      %p15 = scmp.ge.s32.totalorder %s14, 6
      %s24 = sphi 0, %s26
      %s27 = sphi 0, %s24
      %s28 = sphi 0, %s27
      %s44 = sphi 0, %s28
      %s50 = sphi 0, %s52
      %s53 = sphi 0, %s50
      %s54 = sphi 0, %s53
      %s70 = sphi 0, %s54
      %s74 = sphi 0, %s74
      %s76 = sphi 0, %s74
      %s77 = sphi 0, %s76
      %s91 = sphi 0, %s77
      %s95 = sphi 0, %s95
      %s97 = sphi 0, %s95
      %s98 = sphi 0, %s97
      %s112 = sphi 0, %s98
      %s116 = sphi 0, %s116
      %s118 = sphi 0, %s116
      %s119 = sphi 0, %s118
      %s133 = sphi 0, %s119
      %s139 = sphi 0, %s141
      %s142 = sphi 0, %s139
      %s143 = sphi 0, %s142
      %s159 = sphi 0, %s143
    $region4: #{tpu_custom_call.1} parent=1 // loop_header_branch
      %17 = sbr.rel (%p15) target = $region8
    $region5: #{tpu_custom_call.1} parent=1 // loop_body
      %s19 = ssub.s32 %s14, 1
      %s20 = ssub.s32 %s14, 2
      %s21 = sadd.s32 %s14, 1
      %s22 = ssub.s32 %s14, %s21
      %p23 = scmp.eq.s32.totalorder %s22, 0
      %s25 = sadd.s32 %s24, 1
      %s26 = scalar_select %p23, %s24, %s25
      %p29 = pneg %p23
      %p30 = scmp.eq.s32.totalorder %s14, 3
      %p31 = por %p29, %p30
      %p32 = scmp.ne.s32.totalorder %s24, %s27
      %p33 = scmp.eq.s32.totalorder %s14, 0
      %p34 = por %p32, %p33
      %p35 = scmp.ne.s32.totalorder %s24, %s27
      %p36 = scmp.eq.s32.totalorder %s19, 3
      %p37 = por %p35, %p36
      %p38 = scmp.ne.s32.totalorder %s27, %s28
      %p39 = scmp.eq.s32.totalorder %s19, 0
      %p40 = por %p38, %p39
      %p41 = scmp.ne.s32.totalorder %s27, %s28
      %p42 = scmp.eq.s32.totalorder %s20, 3
      %p43 = por %p41, %p42
      %p45 = scmp.ne.s32.totalorder %s28, %s44
      %p46 = scmp.eq.s32.totalorder %s20, 0
      %p47 = por %p45, %p46
      %s48 = ssub.s32 %s14, %s21
      %p49 = scmp.eq.s32.totalorder %s48, 0
      %s51 = sadd.s32 %s50, 1
      %s52 = scalar_select %p49, %s50, %s51
      %p55 = pneg %p49
      %p56 = scmp.eq.s32.totalorder %s14, 3
      %p57 = por %p55, %p56
      %p58 = scmp.ne.s32.totalorder %s50, %s53
      %p59 = scmp.eq.s32.totalorder %s14, 0
      %p60 = por %p58, %p59
      %p61 = scmp.ne.s32.totalorder %s50, %s53
      %p62 = scmp.eq.s32.totalorder %s19, 3
      %p63 = por %p61, %p62
      %p64 = scmp.ne.s32.totalorder %s53, %s54
      %p65 = scmp.eq.s32.totalorder %s19, 0
      %p66 = por %p64, %p65
      %p67 = scmp.ne.s32.totalorder %s53, %s54
      %p68 = scmp.eq.s32.totalorder %s20, 3
      %p69 = por %p67, %p68
      %p71 = scmp.ne.s32.totalorder %s54, %s70
      %p72 = scmp.eq.s32.totalorder %s20, 0
      %p73 = por %p71, %p72
      %s75 = sadd.s32 %s74, 1
      %p78 = scmp.eq.s32.totalorder %s14, 3
      %p79 = scmp.ne.s32.totalorder %s74, %s76
      %p80 = scmp.eq.s32.totalorder %s14, 0
      %p81 = por %p79, %p80
      %p82 = scmp.ne.s32.totalorder %s74, %s76
      %p83 = scmp.eq.s32.totalorder %s19, 3
      %p84 = por %p82, %p83
      %p85 = scmp.ne.s32.totalorder %s76, %s77
      %p86 = scmp.eq.s32.totalorder %s19, 0
      %p87 = por %p85, %p86
      %p88 = scmp.ne.s32.totalorder %s76, %s77
      %p89 = scmp.eq.s32.totalorder %s20, 3
      %p90 = por %p88, %p89
      %p92 = scmp.ne.s32.totalorder %s77, %s91
      %p93 = scmp.eq.s32.totalorder %s20, 0
      %p94 = por %p92, %p93
      %s96 = sadd.s32 %s95, 1
      %p99 = scmp.eq.s32.totalorder %s14, 3
      %p100 = scmp.ne.s32.totalorder %s95, %s97
      %p101 = scmp.eq.s32.totalorder %s14, 0
      %p102 = por %p100, %p101
      %p103 = scmp.ne.s32.totalorder %s95, %s97
      %p104 = scmp.eq.s32.totalorder %s19, 3
      %p105 = por %p103, %p104
      %p106 = scmp.ne.s32.totalorder %s97, %s98
      %p107 = scmp.eq.s32.totalorder %s19, 0
      %p108 = por %p106, %p107
      %p109 = scmp.ne.s32.totalorder %s97, %s98
      %p110 = scmp.eq.s32.totalorder %s20, 3
      %p111 = por %p109, %p110
      %p113 = scmp.ne.s32.totalorder %s98, %s112
      %p114 = scmp.eq.s32.totalorder %s20, 0
      %p115 = por %p113, %p114
      %s117 = sadd.s32 %s116, 1
      %p120 = scmp.eq.s32.totalorder %s14, 3
      %p121 = scmp.ne.s32.totalorder %s116, %s118
      %p122 = scmp.eq.s32.totalorder %s14, 0
      %p123 = por %p121, %p122
      %p124 = scmp.ne.s32.totalorder %s116, %s118
      %p125 = scmp.eq.s32.totalorder %s19, 3
      %p126 = por %p124, %p125
      %p127 = scmp.ne.s32.totalorder %s118, %s119
      %p128 = scmp.eq.s32.totalorder %s19, 0
      %p129 = por %p127, %p128
      %p130 = scmp.ne.s32.totalorder %s118, %s119
      %p131 = scmp.eq.s32.totalorder %s20, 3
      %p132 = por %p130, %p131
      %p134 = scmp.ne.s32.totalorder %s119, %s133
      %p135 = scmp.eq.s32.totalorder %s20, 0
      %p136 = por %p134, %p135
      %s137 = ssub.s32 %s14, %s21
      %p138 = scmp.eq.s32.totalorder %s137, 0
      %s140 = sadd.s32 %s139, 1
      %s141 = scalar_select %p138, %s139, %s140
      %p144 = pneg %p138
      %p145 = scmp.eq.s32.totalorder %s14, 3
      %p146 = por %p144, %p145
      %p147 = scmp.ne.s32.totalorder %s139, %s142
      %p148 = scmp.eq.s32.totalorder %s14, 0
      %p149 = por %p147, %p148
      %p150 = scmp.ne.s32.totalorder %s139, %s142
      %p151 = scmp.eq.s32.totalorder %s19, 3
      %p152 = por %p150, %p151
      %p153 = scmp.ne.s32.totalorder %s142, %s143
      %p154 = scmp.eq.s32.totalorder %s19, 0
      %p155 = por %p153, %p154
      %p156 = scmp.ne.s32.totalorder %s142, %s143
      %p157 = scmp.eq.s32.totalorder %s20, 3
      %p158 = por %p156, %p157
      %p160 = scmp.ne.s32.totalorder %s143, %s159
      %p161 = scmp.eq.s32.totalorder %s20, 0
      %p162 = por %p160, %p161
      %p163 = scmp.le.s32.totalorder 1, %s14
      %p164 = scmp.lt.s32.totalorder %s14, 5
      %p165 = pnand %p163, %p164
      %p166 = pneg %p165
      // Predicated region
      $region9: #{tpu_custom_call.1} parent=5 // pred_check
        _
      $region10: #{tpu_custom_call.1} parent=5 // pred_check_branch
        %168 = sbr.rel (%p165) target = $region12
      $region11: #{tpu_custom_call.1} parent=5 // pred_region
        %s169 = ssub.s32 %s14, 1
        // Predicated region
        $region13: #{tpu_custom_call.1} parent=11 // pred_check
          %p170 = pneg %p87
        $region14: #{tpu_custom_call.1} parent=11 // pred_check_branch
          %172 = sbr.rel (%p170) target = $region16
        $region15: #{tpu_custom_call.1} parent=11 // pred_region
          _
        $region16: #{tpu_custom_call.1} parent=11 // pred_fallthru
          _
        // Predicated region
        $region17: #{tpu_custom_call.1} parent=11 // pred_check
          %p173 = pneg %p108
        $region18: #{tpu_custom_call.1} parent=11 // pred_check_branch
          %175 = sbr.rel (%p173) target = $region20
        $region19: #{tpu_custom_call.1} parent=11 // pred_region
          _
        $region20: #{tpu_custom_call.1} parent=11 // pred_fallthru
          _
        // Predicated region
        $region21: #{tpu_custom_call.1} parent=11 // pred_check
          %p176 = pneg %p129
        $region22: #{tpu_custom_call.1} parent=11 // pred_check_branch
          %178 = sbr.rel (%p176) target = $region24
        $region23: #{tpu_custom_call.1} parent=11 // pred_region
          _
        $region24: #{tpu_custom_call.1} parent=11 // pred_fallthru
          _
      $region12: #{tpu_custom_call.1} parent=5 // pred_fallthru
        _
      %p179 = scmp.lt.s32.totalorder %s14, 4
      // Predicated region
      $region25: #{tpu_custom_call.1} parent=5 // pred_check
        %p180 = pneg %p179
      $region26: #{tpu_custom_call.1} parent=5 // pred_check_branch
        %182 = sbr.rel (%p180) target = $region28
      $region27: #{tpu_custom_call.1} parent=5 // pred_region
        // Predicated region
        $region29: #{tpu_custom_call.1} parent=27 // pred_check
          %p183 = pneg %p34
        $region30: #{tpu_custom_call.1} parent=27 // pred_check_branch
          %185 = sbr.rel (%p183) target = $region32
        $region31: #{tpu_custom_call.1} parent=27 // pred_region
          %p186 = scmp.lt.s32.totalorder %s14, 3
          %s187 = scalar_select %p186, %s14, 3
          %s188 = smul.addr %s187, 4
          %s189 = smul.addr %s188, 8
          %s190 = scalar_lea.vmem %s0, %s189
        $region32: #{tpu_custom_call.1} parent=27 // pred_fallthru
          _
        // Predicated region
        $region33: #{tpu_custom_call.1} parent=27 // pred_check
          %p191 = pneg %p60
        $region34: #{tpu_custom_call.1} parent=27 // pred_check_branch
          %193 = sbr.rel (%p191) target = $region36
        $region35: #{tpu_custom_call.1} parent=27 // pred_region
          %p194 = scmp.lt.s32.totalorder %s14, 3
          %s195 = scalar_select %p194, %s14, 3
          %s196 = smul.addr %s195, 32
          %s197 = smul.addr %s196, 8
          %s198 = scalar_lea.vmem %s1, %s197
        $region36: #{tpu_custom_call.1} parent=27 // pred_fallthru
          _
      $region28: #{tpu_custom_call.1} parent=5 // pred_fallthru
        _
      %p199 = scmp.le.s32.totalorder 1, %s14
      %p200 = scmp.lt.s32.totalorder %s14, 5
      %p201 = pnand %p199, %p200
      %p202 = pneg %p201
      // Predicated region
      $region37: #{tpu_custom_call.1} parent=5 // pred_check
        _
      $region38: #{tpu_custom_call.1} parent=5 // pred_check_branch
        %204 = sbr.rel (%p201) target = $region40
      $region39: #{tpu_custom_call.1} parent=5 // pred_region
        %s205 = ssub.s32 %s14, 1
        %p206 = scmp.lt.s32.totalorder %s19, 3
        %s207 = scalar_select %p206, %s19, 3
        %s208 = smul.addr %s207, 4
        %s209 = smul.addr %s208, 8
        %s210 = scalar_lea.vmem %s0, %s209
        %p211 = pneg %p40
        %p212 = pneg %p37
        %p213 = scmp.lt.s32.totalorder %s19, 3
        %s214 = scalar_select %p213, %s19, 3
        %s215 = smul.addr %s214, 32
        %s216 = smul.addr %s215, 8
        %s217 = scalar_lea.vmem %s1, %s216
        %p218 = pneg %p66
        %p219 = pneg %p63
        %p220 = pneg %p87
        %p221 = pneg %p84
        %p222 = pneg %p108
        %p223 = pneg %p105
        %p224 = pneg %p129
        %p225 = pneg %p126
        %p226 = pneg %p155
        %p227 = pneg %p152
        %s228 = sand.u32 %s142, 1
        %s229 = scalar_lea.sflag [#allocation3], %s228
        %s230 = sand.u32 %s142, 1
        %s231 = smul.addr %s230, 16
        %s232 = scalar_lea.vmem [#allocation2], %s231
        %p233 = scmp.lt.s32.totalorder %s19, 3
        %s234 = scalar_select %p233, %s19, 3
        %s235 = smul.addr %s234, 4
        %s236 = smul.addr %s235, 8
        %s237 = scalar_lea.vmem %s0, %s236
        %p238 = scmp.lt.s32.totalorder %s19, 3
        %s239 = scalar_select %p238, %s19, 3
        %s240 = smul.addr %s239, 32
        %s241 = smul.addr %s240, 8
        %s242 = scalar_lea.vmem %s1, %s241
        %v244 = vld [vmem:[%s2] sm:$0xff]
        %v245 = vld [vmem:[%s2 + $0x8] sm:$0xff]
        %v246 = vld [vmem:[%s3] sm:$0xff]
        %v247 = vld [vmem:[%s3 + $0x8] sm:$0xff]
        %v248 = vld [vmem:[%s3 + $0x10] sm:$0xff]
        %v249 = vld [vmem:[%s3 + $0x18] sm:$0xff]
        %v250 = vld [vmem:[%s3 + $0x20] sm:$0xff]
        %v251 = vld [vmem:[%s3 + $0x28] sm:$0xff]
        %v252 = vld [vmem:[%s3 + $0x30] sm:$0xff]
        %v253 = vld [vmem:[%s3 + $0x38] sm:$0xff]
        %v254 = vld [vmem:[%s3 + $0x40] sm:$0xff]
        %v255 = vld [vmem:[%s3 + $0x48] sm:$0xff]
        %v256 = vld [vmem:[%s4] sm:$0xf]
        %v257 = vld [vmem:[%s4 + $0x4] sm:$0xf]
        %v258 = vld [vmem:[%s4 + $0x8] sm:$0xf]
        %v259 = vld [vmem:[%s4 + $0xc] sm:$0xf]
        %v260 = vld [vmem:[%s4 + $0x10] sm:$0xf]
        %v261 = vld [vmem:[%s4 + $0x14] sm:$0xf]
        %v262 = vld [vmem:[%s4 + $0x18] sm:$0xf]
        %v263 = vld [vmem:[%s4 + $0x1c] sm:$0xf]
        %v264 = vld [vmem:[%s4 + $0x20] sm:$0xf]
        %v265 = vld [vmem:[%s4 + $0x24] sm:$0xf]
        %v266 = vld [vmem:[%s4 + $0x28] sm:$0xf]
        %v267 = vld [vmem:[%s4 + $0x2c] sm:$0xf]
        %v268 = vld [vmem:[%s4 + $0x30] sm:$0xf]
        %v269 = vld [vmem:[%s4 + $0x34] sm:$0xf]
        %v270 = vld [vmem:[%s4 + $0x38] sm:$0xf]
        %v271 = vld [vmem:[%s4 + $0x3c] sm:$0xf]
        %v272 = vld [vmem:[%s4 + $0x40] sm:$0xf]
        %v273 = vld [vmem:[%s4 + $0x44] sm:$0xf]
        %v274 = vld [vmem:[%s4 + $0x48] sm:$0xf]
        %v275 = vld [vmem:[%s4 + $0x4c] sm:$0xf]
        %v276 = vld [vmem:[%s4 + $0x50] sm:$0xf]
        %v277 = vld [vmem:[%s4 + $0x54] sm:$0xf]
        %v278 = vld [vmem:[%s4 + $0x58] sm:$0xf]
        %v279 = vld [vmem:[%s4 + $0x5c] sm:$0xf]
        %v280 = vld [vmem:[%s4 + $0x60] sm:$0xf]
        %v281 = vld [vmem:[%s4 + $0x64] sm:$0xf]
        %v282 = vld [vmem:[%s4 + $0x68] sm:$0xf]
        %v283 = vld [vmem:[%s4 + $0x6c] sm:$0xf]
        %v284 = vld [vmem:[%s4 + $0x70] sm:$0xf]
        %v285 = vld [vmem:[%s4 + $0x74] sm:$0xf]
        %v286 = vld [vmem:[%s4 + $0x78] sm:$0xf]
        %v287 = vld [vmem:[%s4 + $0x7c] sm:$0xf]
        %v288 = vld [vmem:[%s4 + $0x80] sm:$0xf]
        %v289 = vld [vmem:[%s4 + $0x84] sm:$0xf]
        %v290 = vld [vmem:[%s4 + $0x88] sm:$0xf]
        %v291 = vld [vmem:[%s4 + $0x8c] sm:$0xf]
        %v292 = vld [vmem:[%s4 + $0x90] sm:$0xf]
        %v293 = vld [vmem:[%s4 + $0x94] sm:$0xf]
        %v294 = vld [vmem:[%s4 + $0x98] sm:$0xf]
        %v295 = vld [vmem:[%s4 + $0x9c] sm:$0xf]
        %v296 = vld [vmem:[%s4 + $0xa0] sm:$0xf]
        %v297 = vld [vmem:[%s4 + $0xa4] sm:$0xf]
        %v298 = vld [vmem:[%s4 + $0xa8] sm:$0xf]
        %v299 = vld [vmem:[%s4 + $0xac] sm:$0xf]
        %v300 = vld [vmem:[%s4 + $0xb0] sm:$0xf]
        %v301 = vld [vmem:[%s4 + $0xb4] sm:$0xf]
        %v302 = vld [vmem:[%s4 + $0xb8] sm:$0xf]
        %v303 = vld [vmem:[%s4 + $0xbc] sm:$0xf]
        %v304 = vld [vmem:[%s4 + $0xc0] sm:$0xf]
        %v305 = vld [vmem:[%s4 + $0xc4] sm:$0xf]
        %v306 = vld [vmem:[%s4 + $0xc8] sm:$0xf]
        %v307 = vld [vmem:[%s4 + $0xcc] sm:$0xf]
        %v308 = vld [vmem:[%s4 + $0xd0] sm:$0xf]
        %v309 = vld [vmem:[%s4 + $0xd4] sm:$0xf]
        %v310 = vld [vmem:[%s4 + $0xd8] sm:$0xf]
        %v311 = vld [vmem:[%s4 + $0xdc] sm:$0xf]
        %v312 = vld [vmem:[%s4 + $0xe0] sm:$0xf]
        %v313 = vld [vmem:[%s4 + $0xe4] sm:$0xf]
        %v314 = vld [vmem:[%s4 + $0xe8] sm:$0xf]
        %v315 = vld [vmem:[%s4 + $0xec] sm:$0xf]
        %v316 = vld [vmem:[%s237] sm:$0xff]
        %v317 = vld [vmem:[%s237 + $0x8] sm:$0xff]
        %v318 = vld [vmem:[%s237 + $0x10] sm:$0xff]
        %v319 = vld [vmem:[%s237 + $0x18] sm:$0xff]
        %v320 = vpack.c.bf16 %v319, %v318
        %v321 = vld [vmem:[%s242] sm:$0xff]
        %v322 = vld [vmem:[%s242 + $0x8] sm:$0xff]
        %v323 = vld [vmem:[%s242 + $0x10] sm:$0xff]
        %v324 = vld [vmem:[%s242 + $0x18] sm:$0xff]
        %v325 = vld [vmem:[%s242 + $0x20] sm:$0xff]
        %v326 = vld [vmem:[%s242 + $0x28] sm:$0xff]
        %v327 = vld [vmem:[%s242 + $0x30] sm:$0xff]
        %v328 = vld [vmem:[%s242 + $0x38] sm:$0xff]
        %v329 = vld [vmem:[%s242 + $0x40] sm:$0xff]
        %v330 = vld [vmem:[%s242 + $0x48] sm:$0xff]
        %v331 = vld [vmem:[%s242 + $0x50] sm:$0xff]
        %v332 = vld [vmem:[%s242 + $0x58] sm:$0xff]
        %v333 = vld [vmem:[%s242 + $0x60] sm:$0xff]
        %v334 = vld [vmem:[%s242 + $0x68] sm:$0xff]
        %v335 = vld [vmem:[%s242 + $0x70] sm:$0xff]
        %v336 = vld [vmem:[%s242 + $0x78] sm:$0xff]
        %v337 = vld [vmem:[%s242 + $0x80] sm:$0xff]
        %v338 = vld [vmem:[%s242 + $0x88] sm:$0xff]
        %v339 = vld [vmem:[%s242 + $0x90] sm:$0xff]
        %v340 = vld [vmem:[%s242 + $0x98] sm:$0xff]
        %v341 = vld [vmem:[%s242 + $0xa0] sm:$0xff]
        %v342 = vld [vmem:[%s242 + $0xa8] sm:$0xff]
        %v343 = vld [vmem:[%s242 + $0xb0] sm:$0xff]
        %v344 = vld [vmem:[%s242 + $0xb8] sm:$0xff]
        %v345 = vld [vmem:[%s242 + $0xc0] sm:$0xff]
        %v346 = vld [vmem:[%s242 + $0xc8] sm:$0xff]
        %v347 = vld [vmem:[%s242 + $0xd0] sm:$0xff]
        %v348 = vld [vmem:[%s242 + $0xd8] sm:$0xff]
        %v349 = vld [vmem:[%s242 + $0xe0] sm:$0xff]
        %v350 = vld [vmem:[%s242 + $0xe8] sm:$0xff]
        %v351 = vld [vmem:[%s242 + $0xf0] sm:$0xff]
        %v352 = vld [vmem:[%s242 + $0xf8] sm:$0xff]
        %v353 = vpack.c.bf16 %v317, %v316
        %v354 = vperm.slane %v244, 0
        %v361 = vunpack.c.l.b16 %v246
        %v362 = vunpack.c.l.b16 %v247
        %v363 = vunpack.c.l.b16 %v248
        %v364 = vunpack.c.l.b16 %v249
        %v365 = vunpack.c.l.b16 %v250
        %v366 = vunpack.c.l.b16 %v251
        %v367 = vpack.c.b16 %v362, %v361
        %v368 = vpack.c.b16 %v364, %v363
        %v369 = vpack.c.b16 %v366, %v365
        %vm373 = vcmask 392192
        %v375 = vsel %vm373, %v353, 0
        %377 = vmatpush.bf16.msra.mxu0 0
        %378 = vmatpush.bf16.msra.mxu0 0
        %379 = vmatpush.bf16.msra.mxu0 0
        %380 = vmatpush.bf16.msra.mxu0 0
        %381 = vmatpush.bf16.msra.mxu0 0
        %382 = vmatpush.bf16.msra.mxu0 %v369
        %383 = vmatpush.bf16.msra.mxu0 %v368
        %384 = vmatpush.bf16.msra.mxu0 %v367
        %385 = vmatmul.bf16.gmra.mxu0 %v375
        %v386 = vpop.f32.mrf.mxu0
        %v387 = vadd.f32 %v354, %v386
        %v388 = vpop.f32.mrf.mxu0
        %v389 = vadd.f32 %v354, %v388
        %390 = vdwg.mxu0
        %v391 = vmax.f32 %v387, 0.0
        %v392 = vmax.f32 %v389, 0.0
        %v393 = vpack.c.bf16 %v392, %v391
        %v398 = vunpack.c.l.b16 %v252
        %v399 = vunpack.c.h.b16 %v252
        %v400 = vunpack.c.l.b16 %v253
        %v401 = vunpack.c.h.b16 %v253
        %v402 = vunpack.c.l.b16 %v254
        %v403 = vunpack.c.h.b16 %v254
        %v404 = vunpack.c.l.b16 %v255
        %v405 = vunpack.c.h.b16 %v255
        %v406 = vpack.c.b16 %v400, %v398
        %v407 = vpack.c.b16 %v401, %v399
        %v408 = vpack.c.b16 %v404, %v402
        %v409 = vpack.c.b16 %v405, %v403
        %vm414 = vcmask 261120
        %v416 = vsel %vm414, %v393, 0
        %418 = vmatpush.bf16.msra.mxu0 0
        %419 = vmatpush.bf16.msra.mxu0 0
        %420 = vmatpush.bf16.msra.mxu0 0
        %421 = vmatpush.bf16.msra.mxu0 0
        %422 = vmatpush.bf16.msra.mxu0 0
        %423 = vmatpush.bf16.msra.mxu0 0
        %424 = vmatpush.bf16.msra.mxu0 %v408
        %425 = vmatpush.bf16.msra.mxu0 %v406
        %426 = vmatmul.bf16.gmra.mxu0 %v416
        %v427 = vpop.f32.mrf.mxu0
        %v428 = vadd.f32 0.0, %v427
        %v429 = vpop.f32.mrf.mxu0
        %v430 = vadd.f32 0.0, %v429
        %431 = vdwg.mxu0
        %432 = vmatpush.bf16.msra.mxu0 0
        %433 = vmatpush.bf16.msra.mxu0 0
        %434 = vmatpush.bf16.msra.mxu0 0
        %435 = vmatpush.bf16.msra.mxu0 0
        %436 = vmatpush.bf16.msra.mxu0 0
        %437 = vmatpush.bf16.msra.mxu0 0
        %438 = vmatpush.bf16.msra.mxu0 %v409
        %439 = vmatpush.bf16.msra.mxu0 %v407
        %440 = vmatmul.bf16.gmra.mxu0 %v416
        %v441 = vpop.f32.mrf.mxu0
        %v442 = vadd.f32 0.0, %v441
        %v443 = vpop.f32.mrf.mxu0
        %v444 = vadd.f32 0.0, %v443
        %445 = vdwg.mxu0
        %v448 = vrot.slane %v428, 1
        %v449 = vrot.slane %v428, 2
        %v450 = vrot.slane %v428, 3
        %v451 = vrot.slane %v428, 4
        %v452 = vrot.slane %v428, 5
        %v453 = vrot.slane %v428, 6
        %v454 = vrot.slane %v428, 7
        %v455 = vrot.slane %v430, 1
        %v456 = vrot.slane %v430, 2
        %v457 = vrot.slane %v430, 3
        %v458 = vrot.slane %v430, 4
        %v459 = vrot.slane %v430, 5
        %v460 = vrot.slane %v430, 6
        %v461 = vrot.slane %v430, 7
        %v462 = vperm.slane %v428, 0
        %v463 = vperm.slane %v448, 0
        %v464 = vperm.slane %v449, 0
        %v465 = vperm.slane %v450, 0
        %v466 = vperm.slane %v451, 0
        %v467 = vperm.slane %v452, 0
        %v468 = vperm.slane %v453, 0
        %v469 = vperm.slane %v454, 0
        %v470 = vperm.slane %v430, 0
        %v471 = vperm.slane %v455, 0
        %v472 = vperm.slane %v456, 0
        %v473 = vperm.slane %v457, 0
        %v474 = vperm.slane %v458, 0
        %v475 = vperm.slane %v459, 0
        %v476 = vperm.slane %v460, 0
        %v477 = vperm.slane %v461, 0
        %v494 = vadd.f32 %v462, %v442
        %v495 = vadd.f32 %v462, %v444
        %v496 = vadd.f32 %v463, %v442
        %v497 = vadd.f32 %v463, %v444
        %v498 = vadd.f32 %v464, %v442
        %v499 = vadd.f32 %v464, %v444
        %v500 = vadd.f32 %v465, %v442
        %v501 = vadd.f32 %v465, %v444
        %v502 = vadd.f32 %v466, %v442
        %v503 = vadd.f32 %v466, %v444
        %v504 = vadd.f32 %v467, %v442
        %v505 = vadd.f32 %v467, %v444
        %v506 = vadd.f32 %v468, %v442
        %v507 = vadd.f32 %v468, %v444
        %v508 = vadd.f32 %v469, %v442
        %v509 = vadd.f32 %v469, %v444
        %v510 = vadd.f32 %v470, %v442
        %v511 = vadd.f32 %v470, %v444
        %v512 = vadd.f32 %v471, %v442
        %v513 = vadd.f32 %v471, %v444
        %v514 = vadd.f32 %v472, %v442
        %v515 = vadd.f32 %v472, %v444
        %v516 = vadd.f32 %v473, %v442
        %v517 = vadd.f32 %v473, %v444
        %v518 = vadd.f32 %v474, %v442
        %v519 = vadd.f32 %v474, %v444
        %v520 = vadd.f32 %v475, %v442
        %v521 = vadd.f32 %v475, %v444
        %v522 = vadd.f32 %v476, %v442
        %v523 = vadd.f32 %v476, %v444
        %v524 = vadd.f32 %v477, %v442
        %v525 = vadd.f32 %v477, %v444
        %v526 = vperm.slane %v244, 1
        %v527 = vadd.f32 %v494, %v526
        %v528 = vadd.f32 %v495, %v526
        %v529 = vadd.f32 %v496, %v526
        %v530 = vadd.f32 %v497, %v526
        %v531 = vadd.f32 %v498, %v526
        %v532 = vadd.f32 %v499, %v526
        %v533 = vadd.f32 %v500, %v526
        %v534 = vadd.f32 %v501, %v526
        %v535 = vadd.f32 %v502, %v526
        %v536 = vadd.f32 %v503, %v526
        %v537 = vadd.f32 %v504, %v526
        %v538 = vadd.f32 %v505, %v526
        %v539 = vadd.f32 %v506, %v526
        %v540 = vadd.f32 %v507, %v526
        %v541 = vadd.f32 %v508, %v526
        %v542 = vadd.f32 %v509, %v526
        %v543 = vadd.f32 %v510, %v526
        %v544 = vadd.f32 %v511, %v526
        %v545 = vadd.f32 %v512, %v526
        %v546 = vadd.f32 %v513, %v526
        %v547 = vadd.f32 %v514, %v526
        %v548 = vadd.f32 %v515, %v526
        %v549 = vadd.f32 %v516, %v526
        %v550 = vadd.f32 %v517, %v526
        %v551 = vadd.f32 %v518, %v526
        %v552 = vadd.f32 %v519, %v526
        %v553 = vadd.f32 %v520, %v526
        %v554 = vadd.f32 %v521, %v526
        %v555 = vadd.f32 %v522, %v526
        %v556 = vadd.f32 %v523, %v526
        %v557 = vadd.f32 %v524, %v526
        %v558 = vadd.f32 %v525, %v526
        %v559 = vmax.f32 %v527, 0.0
        %v560 = vmax.f32 %v528, 0.0
        %v561 = vmax.f32 %v529, 0.0
        %v562 = vmax.f32 %v530, 0.0
        %v563 = vmax.f32 %v531, 0.0
        %v564 = vmax.f32 %v532, 0.0
        %v565 = vmax.f32 %v533, 0.0
        %v566 = vmax.f32 %v534, 0.0
        %v567 = vmax.f32 %v535, 0.0
        %v568 = vmax.f32 %v536, 0.0
        %v569 = vmax.f32 %v537, 0.0
        %v570 = vmax.f32 %v538, 0.0
        %v571 = vmax.f32 %v539, 0.0
        %v572 = vmax.f32 %v540, 0.0
        %v573 = vmax.f32 %v541, 0.0
        %v574 = vmax.f32 %v542, 0.0
        %v575 = vmax.f32 %v543, 0.0
        %v576 = vmax.f32 %v544, 0.0
        %v577 = vmax.f32 %v545, 0.0
        %v578 = vmax.f32 %v546, 0.0
        %v579 = vmax.f32 %v547, 0.0
        %v580 = vmax.f32 %v548, 0.0
        %v581 = vmax.f32 %v549, 0.0
        %v582 = vmax.f32 %v550, 0.0
        %v583 = vmax.f32 %v551, 0.0
        %v584 = vmax.f32 %v552, 0.0
        %v585 = vmax.f32 %v553, 0.0
        %v586 = vmax.f32 %v554, 0.0
        %v587 = vmax.f32 %v555, 0.0
        %v588 = vmax.f32 %v556, 0.0
        %v589 = vmax.f32 %v557, 0.0
        %v590 = vmax.f32 %v558, 0.0
        %v591 = vpack.c.bf16 %v560, %v559
        %v592 = vpack.c.bf16 %v562, %v561
        %v593 = vpack.c.bf16 %v564, %v563
        %v594 = vpack.c.bf16 %v566, %v565
        %v595 = vpack.c.bf16 %v568, %v567
        %v596 = vpack.c.bf16 %v570, %v569
        %v597 = vpack.c.bf16 %v572, %v571
        %v598 = vpack.c.bf16 %v574, %v573
        %v599 = vpack.c.bf16 %v576, %v575
        %v600 = vpack.c.bf16 %v578, %v577
        %v601 = vpack.c.bf16 %v580, %v579
        %v602 = vpack.c.bf16 %v582, %v581
        %v603 = vpack.c.bf16 %v584, %v583
        %v604 = vpack.c.bf16 %v586, %v585
        %v605 = vpack.c.bf16 %v588, %v587
        %v606 = vpack.c.bf16 %v590, %v589
        %608 = vset.pattern.permute.xlu0 0
        %609 = vperm.xlu0 %608, %v321
        %v610 = vpop.permute.xlu0 %609
        %613 = vset.pattern.permute.xlu0 0
        %614 = vperm.xlu0 %613, %v322
        %v615 = vpop.permute.xlu0 %614
        %618 = vset.pattern.permute.xlu0 0
        %619 = vperm.xlu0 %618, %v323
        %v620 = vpop.permute.xlu0 %619
        %623 = vset.pattern.permute.xlu0 0
        %624 = vperm.xlu0 %623, %v324
        %v625 = vpop.permute.xlu0 %624
        %628 = vset.pattern.permute.xlu0 0
        %629 = vperm.xlu0 %628, %v325
        %v630 = vpop.permute.xlu0 %629
        %633 = vset.pattern.permute.xlu0 0
        %634 = vperm.xlu0 %633, %v326
        %v635 = vpop.permute.xlu0 %634
        %638 = vset.pattern.permute.xlu0 0
        %639 = vperm.xlu0 %638, %v327
        %v640 = vpop.permute.xlu0 %639
        %643 = vset.pattern.permute.xlu0 0
        %644 = vperm.xlu0 %643, %v328
        %v645 = vpop.permute.xlu0 %644
        %648 = vset.pattern.permute.xlu0 0
        %649 = vperm.xlu0 %648, %v329
        %v650 = vpop.permute.xlu0 %649
        %653 = vset.pattern.permute.xlu0 0
        %654 = vperm.xlu0 %653, %v330
        %v655 = vpop.permute.xlu0 %654
        %658 = vset.pattern.permute.xlu0 0
        %659 = vperm.xlu0 %658, %v331
        %v660 = vpop.permute.xlu0 %659
        %663 = vset.pattern.permute.xlu0 0
        %664 = vperm.xlu0 %663, %v332
        %v665 = vpop.permute.xlu0 %664
        %668 = vset.pattern.permute.xlu0 0
        %669 = vperm.xlu0 %668, %v333
        %v670 = vpop.permute.xlu0 %669
        %673 = vset.pattern.permute.xlu0 0
        %674 = vperm.xlu0 %673, %v334
        %v675 = vpop.permute.xlu0 %674
        %678 = vset.pattern.permute.xlu0 0
        %679 = vperm.xlu0 %678, %v335
        %v680 = vpop.permute.xlu0 %679
        %683 = vset.pattern.permute.xlu0 0
        %684 = vperm.xlu0 %683, %v336
        %v685 = vpop.permute.xlu0 %684
        %688 = vset.pattern.permute.xlu0 0
        %689 = vperm.xlu0 %688, %v337
        %v690 = vpop.permute.xlu0 %689
        %693 = vset.pattern.permute.xlu0 0
        %694 = vperm.xlu0 %693, %v338
        %v695 = vpop.permute.xlu0 %694
        %698 = vset.pattern.permute.xlu0 0
        %699 = vperm.xlu0 %698, %v339
        %v700 = vpop.permute.xlu0 %699
        %703 = vset.pattern.permute.xlu0 0
        %704 = vperm.xlu0 %703, %v340
        %v705 = vpop.permute.xlu0 %704
        %708 = vset.pattern.permute.xlu0 0
        %709 = vperm.xlu0 %708, %v341
        %v710 = vpop.permute.xlu0 %709
        %713 = vset.pattern.permute.xlu0 0
        %714 = vperm.xlu0 %713, %v342
        %v715 = vpop.permute.xlu0 %714
        %718 = vset.pattern.permute.xlu0 0
        %719 = vperm.xlu0 %718, %v343
        %v720 = vpop.permute.xlu0 %719
        %723 = vset.pattern.permute.xlu0 0
        %724 = vperm.xlu0 %723, %v344
        %v725 = vpop.permute.xlu0 %724
        %728 = vset.pattern.permute.xlu0 0
        %729 = vperm.xlu0 %728, %v345
        %v730 = vpop.permute.xlu0 %729
        %733 = vset.pattern.permute.xlu0 0
        %734 = vperm.xlu0 %733, %v346
        %v735 = vpop.permute.xlu0 %734
        %738 = vset.pattern.permute.xlu0 0
        %739 = vperm.xlu0 %738, %v347
        %v740 = vpop.permute.xlu0 %739
        %743 = vset.pattern.permute.xlu0 0
        %744 = vperm.xlu0 %743, %v348
        %v745 = vpop.permute.xlu0 %744
        %748 = vset.pattern.permute.xlu0 0
        %749 = vperm.xlu0 %748, %v349
        %v750 = vpop.permute.xlu0 %749
        %753 = vset.pattern.permute.xlu0 0
        %754 = vperm.xlu0 %753, %v350
        %v755 = vpop.permute.xlu0 %754
        %758 = vset.pattern.permute.xlu0 0
        %759 = vperm.xlu0 %758, %v351
        %v760 = vpop.permute.xlu0 %759
        %763 = vset.pattern.permute.xlu0 0
        %764 = vperm.xlu0 %763, %v352
        %v765 = vpop.permute.xlu0 %764
        %v767 = vperm.slane %v245, 0
        %v768 = vmul.f32 %v610, %v767
        %v769 = vmul.f32 %v615, %v767
        %v770 = vmul.f32 %v620, %v767
        %v771 = vmul.f32 %v625, %v767
        %v772 = vmul.f32 %v630, %v767
        %v773 = vmul.f32 %v635, %v767
        %v774 = vmul.f32 %v640, %v767
        %v775 = vmul.f32 %v645, %v767
        %v776 = vmul.f32 %v650, %v767
        %v777 = vmul.f32 %v655, %v767
        %v778 = vmul.f32 %v660, %v767
        %v779 = vmul.f32 %v665, %v767
        %v780 = vmul.f32 %v670, %v767
        %v781 = vmul.f32 %v675, %v767
        %v782 = vmul.f32 %v680, %v767
        %v783 = vmul.f32 %v685, %v767
        %v784 = vmul.f32 %v690, %v767
        %v785 = vmul.f32 %v695, %v767
        %v786 = vmul.f32 %v700, %v767
        %v787 = vmul.f32 %v705, %v767
        %v788 = vmul.f32 %v710, %v767
        %v789 = vmul.f32 %v715, %v767
        %v790 = vmul.f32 %v720, %v767
        %v791 = vmul.f32 %v725, %v767
        %v792 = vmul.f32 %v730, %v767
        %v793 = vmul.f32 %v735, %v767
        %v794 = vmul.f32 %v740, %v767
        %v795 = vmul.f32 %v745, %v767
        %v796 = vmul.f32 %v750, %v767
        %v797 = vmul.f32 %v755, %v767
        %v798 = vmul.f32 %v760, %v767
        %v799 = vmul.f32 %v765, %v767
        %800 = vset.pattern.permute.xlu0 1
        %801 = vperm.xlu0 %800, %v321
        %v802 = vpop.permute.xlu0 %801
        %804 = vset.pattern.permute.xlu0 1
        %805 = vperm.xlu0 %804, %v322
        %v806 = vpop.permute.xlu0 %805
        %808 = vset.pattern.permute.xlu0 1
        %809 = vperm.xlu0 %808, %v323
        %v810 = vpop.permute.xlu0 %809
        %812 = vset.pattern.permute.xlu0 1
        %813 = vperm.xlu0 %812, %v324
        %v814 = vpop.permute.xlu0 %813
        %816 = vset.pattern.permute.xlu0 1
        %817 = vperm.xlu0 %816, %v325
        %v818 = vpop.permute.xlu0 %817
        %820 = vset.pattern.permute.xlu0 1
        %821 = vperm.xlu0 %820, %v326
        %v822 = vpop.permute.xlu0 %821
        %824 = vset.pattern.permute.xlu0 1
        %825 = vperm.xlu0 %824, %v327
        %v826 = vpop.permute.xlu0 %825
        %828 = vset.pattern.permute.xlu0 1
        %829 = vperm.xlu0 %828, %v328
        %v830 = vpop.permute.xlu0 %829
        %832 = vset.pattern.permute.xlu0 1
        %833 = vperm.xlu0 %832, %v329
        %v834 = vpop.permute.xlu0 %833
        %836 = vset.pattern.permute.xlu0 1
        %837 = vperm.xlu0 %836, %v330
        %v838 = vpop.permute.xlu0 %837
        %840 = vset.pattern.permute.xlu0 1
        %841 = vperm.xlu0 %840, %v331
        %v842 = vpop.permute.xlu0 %841
        %844 = vset.pattern.permute.xlu0 1
        %845 = vperm.xlu0 %844, %v332
        %v846 = vpop.permute.xlu0 %845
        %848 = vset.pattern.permute.xlu0 1
        %849 = vperm.xlu0 %848, %v333
        %v850 = vpop.permute.xlu0 %849
        %852 = vset.pattern.permute.xlu0 1
        %853 = vperm.xlu0 %852, %v334
        %v854 = vpop.permute.xlu0 %853
        %856 = vset.pattern.permute.xlu0 1
        %857 = vperm.xlu0 %856, %v335
        %v858 = vpop.permute.xlu0 %857
        %860 = vset.pattern.permute.xlu0 1
        %861 = vperm.xlu0 %860, %v336
        %v862 = vpop.permute.xlu0 %861
        %864 = vset.pattern.permute.xlu0 1
        %865 = vperm.xlu0 %864, %v337
        %v866 = vpop.permute.xlu0 %865
        %868 = vset.pattern.permute.xlu0 1
        %869 = vperm.xlu0 %868, %v338
        %v870 = vpop.permute.xlu0 %869
        %872 = vset.pattern.permute.xlu0 1
        %873 = vperm.xlu0 %872, %v339
        %v874 = vpop.permute.xlu0 %873
        %876 = vset.pattern.permute.xlu0 1
        %877 = vperm.xlu0 %876, %v340
        %v878 = vpop.permute.xlu0 %877
        %880 = vset.pattern.permute.xlu0 1
        %881 = vperm.xlu0 %880, %v341
        %v882 = vpop.permute.xlu0 %881
        %884 = vset.pattern.permute.xlu0 1
        %885 = vperm.xlu0 %884, %v342
        %v886 = vpop.permute.xlu0 %885
        %888 = vset.pattern.permute.xlu0 1
        %889 = vperm.xlu0 %888, %v343
        %v890 = vpop.permute.xlu0 %889
        %892 = vset.pattern.permute.xlu0 1
        %893 = vperm.xlu0 %892, %v344
        %v894 = vpop.permute.xlu0 %893
        %896 = vset.pattern.permute.xlu0 1
        %897 = vperm.xlu0 %896, %v345
        %v898 = vpop.permute.xlu0 %897
        %900 = vset.pattern.permute.xlu0 1
        %901 = vperm.xlu0 %900, %v346
        %v902 = vpop.permute.xlu0 %901
        %904 = vset.pattern.permute.xlu0 1
        %905 = vperm.xlu0 %904, %v347
        %v906 = vpop.permute.xlu0 %905
        %908 = vset.pattern.permute.xlu0 1
        %909 = vperm.xlu0 %908, %v348
        %v910 = vpop.permute.xlu0 %909
        %912 = vset.pattern.permute.xlu0 1
        %913 = vperm.xlu0 %912, %v349
        %v914 = vpop.permute.xlu0 %913
        %916 = vset.pattern.permute.xlu0 1
        %917 = vperm.xlu0 %916, %v350
        %v918 = vpop.permute.xlu0 %917
        %920 = vset.pattern.permute.xlu0 1
        %921 = vperm.xlu0 %920, %v351
        %v922 = vpop.permute.xlu0 %921
        %924 = vset.pattern.permute.xlu0 1
        %925 = vperm.xlu0 %924, %v352
        %v926 = vpop.permute.xlu0 %925
        %v928 = vperm.slane %v245, 1
        %v929 = vmul.f32 %v802, %v928
        %v930 = vmul.f32 %v806, %v928
        %v931 = vmul.f32 %v810, %v928
        %v932 = vmul.f32 %v814, %v928
        %v933 = vmul.f32 %v818, %v928
        %v934 = vmul.f32 %v822, %v928
        %v935 = vmul.f32 %v826, %v928
        %v936 = vmul.f32 %v830, %v928
        %v937 = vmul.f32 %v834, %v928
        %v938 = vmul.f32 %v838, %v928
        %v939 = vmul.f32 %v842, %v928
        %v940 = vmul.f32 %v846, %v928
        %v941 = vmul.f32 %v850, %v928
        %v942 = vmul.f32 %v854, %v928
        %v943 = vmul.f32 %v858, %v928
        %v944 = vmul.f32 %v862, %v928
        %v945 = vmul.f32 %v866, %v928
        %v946 = vmul.f32 %v870, %v928
        %v947 = vmul.f32 %v874, %v928
        %v948 = vmul.f32 %v878, %v928
        %v949 = vmul.f32 %v882, %v928
        %v950 = vmul.f32 %v886, %v928
        %v951 = vmul.f32 %v890, %v928
        %v952 = vmul.f32 %v894, %v928
        %v953 = vmul.f32 %v898, %v928
        %v954 = vmul.f32 %v902, %v928
        %v955 = vmul.f32 %v906, %v928
        %v956 = vmul.f32 %v910, %v928
        %v957 = vmul.f32 %v914, %v928
        %v958 = vmul.f32 %v918, %v928
        %v959 = vmul.f32 %v922, %v928
        %v960 = vmul.f32 %v926, %v928
        %v961 = vadd.f32 %v768, %v929
        %v962 = vadd.f32 %v769, %v930
        %v963 = vadd.f32 %v770, %v931
        %v964 = vadd.f32 %v771, %v932
        %v965 = vadd.f32 %v772, %v933
        %v966 = vadd.f32 %v773, %v934
        %v967 = vadd.f32 %v774, %v935
        %v968 = vadd.f32 %v775, %v936
        %v969 = vadd.f32 %v776, %v937
        %v970 = vadd.f32 %v777, %v938
        %v971 = vadd.f32 %v778, %v939
        %v972 = vadd.f32 %v779, %v940
        %v973 = vadd.f32 %v780, %v941
        %v974 = vadd.f32 %v781, %v942
        %v975 = vadd.f32 %v782, %v943
        %v976 = vadd.f32 %v783, %v944
        %v977 = vadd.f32 %v784, %v945
        %v978 = vadd.f32 %v785, %v946
        %v979 = vadd.f32 %v786, %v947
        %v980 = vadd.f32 %v787, %v948
        %v981 = vadd.f32 %v788, %v949
        %v982 = vadd.f32 %v789, %v950
        %v983 = vadd.f32 %v790, %v951
        %v984 = vadd.f32 %v791, %v952
        %v985 = vadd.f32 %v792, %v953
        %v986 = vadd.f32 %v793, %v954
        %v987 = vadd.f32 %v794, %v955
        %v988 = vadd.f32 %v795, %v956
        %v989 = vadd.f32 %v796, %v957
        %v990 = vadd.f32 %v797, %v958
        %v991 = vadd.f32 %v798, %v959
        %v992 = vadd.f32 %v799, %v960
        %993 = vset.pattern.permute.xlu0 2
        %994 = vperm.xlu0 %993, %v321
        %v995 = vpop.permute.xlu0 %994
        %997 = vset.pattern.permute.xlu0 2
        %998 = vperm.xlu0 %997, %v322
        %v999 = vpop.permute.xlu0 %998
        %1001 = vset.pattern.permute.xlu0 2
        %1002 = vperm.xlu0 %1001, %v323
        %v1003 = vpop.permute.xlu0 %1002
        %1005 = vset.pattern.permute.xlu0 2
        %1006 = vperm.xlu0 %1005, %v324
        %v1007 = vpop.permute.xlu0 %1006
        %1009 = vset.pattern.permute.xlu0 2
        %1010 = vperm.xlu0 %1009, %v325
        %v1011 = vpop.permute.xlu0 %1010
        %1013 = vset.pattern.permute.xlu0 2
        %1014 = vperm.xlu0 %1013, %v326
        %v1015 = vpop.permute.xlu0 %1014
        %1017 = vset.pattern.permute.xlu0 2
        %1018 = vperm.xlu0 %1017, %v327
        %v1019 = vpop.permute.xlu0 %1018
        %1021 = vset.pattern.permute.xlu0 2
        %1022 = vperm.xlu0 %1021, %v328
        %v1023 = vpop.permute.xlu0 %1022
        %1025 = vset.pattern.permute.xlu0 2
        %1026 = vperm.xlu0 %1025, %v329
        %v1027 = vpop.permute.xlu0 %1026
        %1029 = vset.pattern.permute.xlu0 2
        %1030 = vperm.xlu0 %1029, %v330
        %v1031 = vpop.permute.xlu0 %1030
        %1033 = vset.pattern.permute.xlu0 2
        %1034 = vperm.xlu0 %1033, %v331
        %v1035 = vpop.permute.xlu0 %1034
        %1037 = vset.pattern.permute.xlu0 2
        %1038 = vperm.xlu0 %1037, %v332
        %v1039 = vpop.permute.xlu0 %1038
        %1041 = vset.pattern.permute.xlu0 2
        %1042 = vperm.xlu0 %1041, %v333
        %v1043 = vpop.permute.xlu0 %1042
        %1045 = vset.pattern.permute.xlu0 2
        %1046 = vperm.xlu0 %1045, %v334
        %v1047 = vpop.permute.xlu0 %1046
        %1049 = vset.pattern.permute.xlu0 2
        %1050 = vperm.xlu0 %1049, %v335
        %v1051 = vpop.permute.xlu0 %1050
        %1053 = vset.pattern.permute.xlu0 2
        %1054 = vperm.xlu0 %1053, %v336
        %v1055 = vpop.permute.xlu0 %1054
        %1057 = vset.pattern.permute.xlu0 2
        %1058 = vperm.xlu0 %1057, %v337
        %v1059 = vpop.permute.xlu0 %1058
        %1061 = vset.pattern.permute.xlu0 2
        %1062 = vperm.xlu0 %1061, %v338
        %v1063 = vpop.permute.xlu0 %1062
        %1065 = vset.pattern.permute.xlu0 2
        %1066 = vperm.xlu0 %1065, %v339
        %v1067 = vpop.permute.xlu0 %1066
        %1069 = vset.pattern.permute.xlu0 2
        %1070 = vperm.xlu0 %1069, %v340
        %v1071 = vpop.permute.xlu0 %1070
        %1073 = vset.pattern.permute.xlu0 2
        %1074 = vperm.xlu0 %1073, %v341
        %v1075 = vpop.permute.xlu0 %1074
        %1077 = vset.pattern.permute.xlu0 2
        %1078 = vperm.xlu0 %1077, %v342
        %v1079 = vpop.permute.xlu0 %1078
        %1081 = vset.pattern.permute.xlu0 2
        %1082 = vperm.xlu0 %1081, %v343
        %v1083 = vpop.permute.xlu0 %1082
        %1085 = vset.pattern.permute.xlu0 2
        %1086 = vperm.xlu0 %1085, %v344
        %v1087 = vpop.permute.xlu0 %1086
        %1089 = vset.pattern.permute.xlu0 2
        %1090 = vperm.xlu0 %1089, %v345
        %v1091 = vpop.permute.xlu0 %1090
        %1093 = vset.pattern.permute.xlu0 2
        %1094 = vperm.xlu0 %1093, %v346
        %v1095 = vpop.permute.xlu0 %1094
        %1097 = vset.pattern.permute.xlu0 2
        %1098 = vperm.xlu0 %1097, %v347
        %v1099 = vpop.permute.xlu0 %1098
        %1101 = vset.pattern.permute.xlu0 2
        %1102 = vperm.xlu0 %1101, %v348
        %v1103 = vpop.permute.xlu0 %1102
        %1105 = vset.pattern.permute.xlu0 2
        %1106 = vperm.xlu0 %1105, %v349
        %v1107 = vpop.permute.xlu0 %1106
        %1109 = vset.pattern.permute.xlu0 2
        %1110 = vperm.xlu0 %1109, %v350
        %v1111 = vpop.permute.xlu0 %1110
        %1113 = vset.pattern.permute.xlu0 2
        %1114 = vperm.xlu0 %1113, %v351
        %v1115 = vpop.permute.xlu0 %1114
        %1117 = vset.pattern.permute.xlu0 2
        %1118 = vperm.xlu0 %1117, %v352
        %v1119 = vpop.permute.xlu0 %1118
        %v1121 = vperm.slane %v245, 2
        %v1122 = vmul.f32 %v995, %v1121
        %v1123 = vmul.f32 %v999, %v1121
        %v1124 = vmul.f32 %v1003, %v1121
        %v1125 = vmul.f32 %v1007, %v1121
        %v1126 = vmul.f32 %v1011, %v1121
        %v1127 = vmul.f32 %v1015, %v1121
        %v1128 = vmul.f32 %v1019, %v1121
        %v1129 = vmul.f32 %v1023, %v1121
        %v1130 = vmul.f32 %v1027, %v1121
        %v1131 = vmul.f32 %v1031, %v1121
        %v1132 = vmul.f32 %v1035, %v1121
        %v1133 = vmul.f32 %v1039, %v1121
        %v1134 = vmul.f32 %v1043, %v1121
        %v1135 = vmul.f32 %v1047, %v1121
        %v1136 = vmul.f32 %v1051, %v1121
        %v1137 = vmul.f32 %v1055, %v1121
        %v1138 = vmul.f32 %v1059, %v1121
        %v1139 = vmul.f32 %v1063, %v1121
        %v1140 = vmul.f32 %v1067, %v1121
        %v1141 = vmul.f32 %v1071, %v1121
        %v1142 = vmul.f32 %v1075, %v1121
        %v1143 = vmul.f32 %v1079, %v1121
        %v1144 = vmul.f32 %v1083, %v1121
        %v1145 = vmul.f32 %v1087, %v1121
        %v1146 = vmul.f32 %v1091, %v1121
        %v1147 = vmul.f32 %v1095, %v1121
        %v1148 = vmul.f32 %v1099, %v1121
        %v1149 = vmul.f32 %v1103, %v1121
        %v1150 = vmul.f32 %v1107, %v1121
        %v1151 = vmul.f32 %v1111, %v1121
        %v1152 = vmul.f32 %v1115, %v1121
        %v1153 = vmul.f32 %v1119, %v1121
        %v1154 = vadd.f32 %v961, %v1122
        %v1155 = vadd.f32 %v962, %v1123
        %v1156 = vadd.f32 %v963, %v1124
        %v1157 = vadd.f32 %v964, %v1125
        %v1158 = vadd.f32 %v965, %v1126
        %v1159 = vadd.f32 %v966, %v1127
        %v1160 = vadd.f32 %v967, %v1128
        %v1161 = vadd.f32 %v968, %v1129
        %v1162 = vadd.f32 %v969, %v1130
        %v1163 = vadd.f32 %v970, %v1131
        %v1164 = vadd.f32 %v971, %v1132
        %v1165 = vadd.f32 %v972, %v1133
        %v1166 = vadd.f32 %v973, %v1134
        %v1167 = vadd.f32 %v974, %v1135
        %v1168 = vadd.f32 %v975, %v1136
        %v1169 = vadd.f32 %v976, %v1137
        %v1170 = vadd.f32 %v977, %v1138
        %v1171 = vadd.f32 %v978, %v1139
        %v1172 = vadd.f32 %v979, %v1140
        %v1173 = vadd.f32 %v980, %v1141
        %v1174 = vadd.f32 %v981, %v1142
        %v1175 = vadd.f32 %v982, %v1143
        %v1176 = vadd.f32 %v983, %v1144
        %v1177 = vadd.f32 %v984, %v1145
        %v1178 = vadd.f32 %v985, %v1146
        %v1179 = vadd.f32 %v986, %v1147
        %v1180 = vadd.f32 %v987, %v1148
        %v1181 = vadd.f32 %v988, %v1149
        %v1182 = vadd.f32 %v989, %v1150
        %v1183 = vadd.f32 %v990, %v1151
        %v1184 = vadd.f32 %v991, %v1152
        %v1185 = vadd.f32 %v992, %v1153
        %v1198 = vunpack.c.l.b16 %v256
        %v1199 = vunpack.c.l.b16 %v257
        %v1200 = vunpack.c.l.b16 %v258
        %v1201 = vunpack.c.l.b16 %v259
        %v1202 = vunpack.c.l.b16 %v260
        %v1203 = vunpack.c.l.b16 %v261
        %v1204 = vunpack.c.l.b16 %v262
        %v1205 = vunpack.c.l.b16 %v263
        %v1206 = vunpack.c.l.b16 %v264
        %v1207 = vunpack.c.l.b16 %v265
        %v1208 = vunpack.c.l.b16 %v266
        %v1209 = vunpack.c.l.b16 %v267
        %v1210 = vpack.c.b16 %v1199, %v1198
        %v1211 = vpack.c.b16 %v1201, %v1200
        %v1212 = vpack.c.b16 %v1203, %v1202
        %v1213 = vpack.c.b16 %v1205, %v1204
        %v1214 = vpack.c.b16 %v1207, %v1206
        %v1215 = vpack.c.b16 %v1209, %v1208
        %vm1222 = vcmask 785408
        %v1224 = vsel %vm1222, %v591, 0
        %v1227 = vsel %vm1222, %v592, 0
        %v1230 = vsel %vm1222, %v593, 0
        %v1233 = vsel %vm1222, %v594, 0
        %v1236 = vsel %vm1222, %v595, 0
        %v1239 = vsel %vm1222, %v596, 0
        %v1242 = vsel %vm1222, %v597, 0
        %v1245 = vsel %vm1222, %v598, 0
        %v1248 = vsel %vm1222, %v599, 0
        %v1251 = vsel %vm1222, %v600, 0
        %v1254 = vsel %vm1222, %v601, 0
        %v1257 = vsel %vm1222, %v602, 0
        %v1260 = vsel %vm1222, %v603, 0
        %v1263 = vsel %vm1222, %v604, 0
        %v1266 = vsel %vm1222, %v605, 0
        %v1269 = vsel %vm1222, %v606, 0
        %1271 = vmatpush.bf16.msra.mxu0 0
        %1272 = vmatpush.bf16.msra.mxu0 0
        %1273 = vmatpush.bf16.msra.mxu0 %v1215
        %1274 = vmatpush.bf16.msra.mxu0 %v1214
        %1275 = vmatpush.bf16.msra.mxu0 %v1213
        %1276 = vmatpush.bf16.msra.mxu0 %v1212
        %1277 = vmatpush.bf16.msra.mxu0 %v1211
        %1278 = vmatpush.bf16.msra.mxu0 %v1210
        %1279 = vmatmul.bf16.gmra.mxu0 %v1224
        %v1280 = vpop.f32.mrf.mxu0
        %v1281 = vadd.f32 %v1154, %v1280
        %v1282 = vpop.f32.mrf.mxu0
        %v1283 = vadd.f32 %v1155, %v1282
        %1284 = vmatmul.bf16.gmra.mxu0 %v1227
        %v1285 = vpop.f32.mrf.mxu0
        %v1286 = vadd.f32 %v1156, %v1285
        %v1287 = vpop.f32.mrf.mxu0
        %v1288 = vadd.f32 %v1157, %v1287
        %1289 = vmatmul.bf16.gmra.mxu0 %v1230
        %v1290 = vpop.f32.mrf.mxu0
        %v1291 = vadd.f32 %v1158, %v1290
        %v1292 = vpop.f32.mrf.mxu0
        %v1293 = vadd.f32 %v1159, %v1292
        %1294 = vmatmul.bf16.gmra.mxu0 %v1233
        %v1295 = vpop.f32.mrf.mxu0
        %v1296 = vadd.f32 %v1160, %v1295
        %v1297 = vpop.f32.mrf.mxu0
        %v1298 = vadd.f32 %v1161, %v1297
        %1299 = vmatmul.bf16.gmra.mxu0 %v1236
        %v1300 = vpop.f32.mrf.mxu0
        %v1301 = vadd.f32 %v1162, %v1300
        %v1302 = vpop.f32.mrf.mxu0
        %v1303 = vadd.f32 %v1163, %v1302
        %1304 = vmatmul.bf16.gmra.mxu0 %v1239
        %v1305 = vpop.f32.mrf.mxu0
        %v1306 = vadd.f32 %v1164, %v1305
        %v1307 = vpop.f32.mrf.mxu0
        %v1308 = vadd.f32 %v1165, %v1307
        %1309 = vmatmul.bf16.gmra.mxu0 %v1242
        %v1310 = vpop.f32.mrf.mxu0
        %v1311 = vadd.f32 %v1166, %v1310
        %v1312 = vpop.f32.mrf.mxu0
        %v1313 = vadd.f32 %v1167, %v1312
        %1314 = vmatmul.bf16.gmra.mxu0 %v1245
        %v1315 = vpop.f32.mrf.mxu0
        %v1316 = vadd.f32 %v1168, %v1315
        %v1317 = vpop.f32.mrf.mxu0
        %v1318 = vadd.f32 %v1169, %v1317
        %1319 = vmatmul.bf16.gmra.mxu0 %v1248
        %v1320 = vpop.f32.mrf.mxu0
        %v1321 = vadd.f32 %v1170, %v1320
        %v1322 = vpop.f32.mrf.mxu0
        %v1323 = vadd.f32 %v1171, %v1322
        %1324 = vmatmul.bf16.gmra.mxu0 %v1251
        %v1325 = vpop.f32.mrf.mxu0
        %v1326 = vadd.f32 %v1172, %v1325
        %v1327 = vpop.f32.mrf.mxu0
        %v1328 = vadd.f32 %v1173, %v1327
        %1329 = vmatmul.bf16.gmra.mxu0 %v1254
        %v1330 = vpop.f32.mrf.mxu0
        %v1331 = vadd.f32 %v1174, %v1330
        %v1332 = vpop.f32.mrf.mxu0
        %v1333 = vadd.f32 %v1175, %v1332
        %1334 = vmatmul.bf16.gmra.mxu0 %v1257
        %v1335 = vpop.f32.mrf.mxu0
        %v1336 = vadd.f32 %v1176, %v1335
        %v1337 = vpop.f32.mrf.mxu0
        %v1338 = vadd.f32 %v1177, %v1337
        %1339 = vmatmul.bf16.gmra.mxu0 %v1260
        %v1340 = vpop.f32.mrf.mxu0
        %v1341 = vadd.f32 %v1178, %v1340
        %v1342 = vpop.f32.mrf.mxu0
        %v1343 = vadd.f32 %v1179, %v1342
        %1344 = vmatmul.bf16.gmra.mxu0 %v1263
        %v1345 = vpop.f32.mrf.mxu0
        %v1346 = vadd.f32 %v1180, %v1345
        %v1347 = vpop.f32.mrf.mxu0
        %v1348 = vadd.f32 %v1181, %v1347
        %1349 = vmatmul.bf16.gmra.mxu0 %v1266
        %v1350 = vpop.f32.mrf.mxu0
        %v1351 = vadd.f32 %v1182, %v1350
        %v1352 = vpop.f32.mrf.mxu0
        %v1353 = vadd.f32 %v1183, %v1352
        %1354 = vmatmul.bf16.gmra.mxu0 %v1269
        %v1355 = vpop.f32.mrf.mxu0
        %v1356 = vadd.f32 %v1184, %v1355
        %v1357 = vpop.f32.mrf.mxu0
        %v1358 = vadd.f32 %v1185, %v1357
        %1359 = vdwg.mxu0
        %v1360 = vsel %vm1222, %v1281, -inf
        %v1361 = vsel %vm1222, %v1283, -inf
        %v1362 = vmax.f32 %v1360, %v1361
        %v1363 = vrot.slane %v1362, 4
        %v1364 = vmax.f32 %v1362, %v1363
        %v1365 = vrot.slane %v1364, 2
        %v1366 = vmax.f32 %v1364, %v1365
        %v1367 = vrot.slane %v1366, 1
        %v1368 = vmax.f32 %v1366, %v1367
        %v1369 = vsel %vm1222, %v1286, -inf
        %v1370 = vsel %vm1222, %v1288, -inf
        %v1371 = vmax.f32 %v1369, %v1370
        %v1372 = vrot.slane %v1371, 4
        %v1373 = vmax.f32 %v1371, %v1372
        %v1374 = vrot.slane %v1373, 2
        %v1375 = vmax.f32 %v1373, %v1374
        %v1376 = vrot.slane %v1375, 1
        %v1377 = vmax.f32 %v1375, %v1376
        %v1378 = vsel %vm1222, %v1291, -inf
        %v1379 = vsel %vm1222, %v1293, -inf
        %v1380 = vmax.f32 %v1378, %v1379
        %v1381 = vrot.slane %v1380, 4
        %v1382 = vmax.f32 %v1380, %v1381
        %v1383 = vrot.slane %v1382, 2
        %v1384 = vmax.f32 %v1382, %v1383
        %v1385 = vrot.slane %v1384, 1
        %v1386 = vmax.f32 %v1384, %v1385
        %v1387 = vsel %vm1222, %v1296, -inf
        %v1388 = vsel %vm1222, %v1298, -inf
        %v1389 = vmax.f32 %v1387, %v1388
        %v1390 = vrot.slane %v1389, 4
        %v1391 = vmax.f32 %v1389, %v1390
        %v1392 = vrot.slane %v1391, 2
        %v1393 = vmax.f32 %v1391, %v1392
        %v1394 = vrot.slane %v1393, 1
        %v1395 = vmax.f32 %v1393, %v1394
        %v1396 = vsel %vm1222, %v1301, -inf
        %v1397 = vsel %vm1222, %v1303, -inf
        %v1398 = vmax.f32 %v1396, %v1397
        %v1399 = vrot.slane %v1398, 4
        %v1400 = vmax.f32 %v1398, %v1399
        %v1401 = vrot.slane %v1400, 2
        %v1402 = vmax.f32 %v1400, %v1401
        %v1403 = vrot.slane %v1402, 1
        %v1404 = vmax.f32 %v1402, %v1403
        %v1405 = vsel %vm1222, %v1306, -inf
        %v1406 = vsel %vm1222, %v1308, -inf
        %v1407 = vmax.f32 %v1405, %v1406
        %v1408 = vrot.slane %v1407, 4
        %v1409 = vmax.f32 %v1407, %v1408
        %v1410 = vrot.slane %v1409, 2
        %v1411 = vmax.f32 %v1409, %v1410
        %v1412 = vrot.slane %v1411, 1
        %v1413 = vmax.f32 %v1411, %v1412
        %v1414 = vsel %vm1222, %v1311, -inf
        %v1415 = vsel %vm1222, %v1313, -inf
        %v1416 = vmax.f32 %v1414, %v1415
        %v1417 = vrot.slane %v1416, 4
        %v1418 = vmax.f32 %v1416, %v1417
        %v1419 = vrot.slane %v1418, 2
        %v1420 = vmax.f32 %v1418, %v1419
        %v1421 = vrot.slane %v1420, 1
        %v1422 = vmax.f32 %v1420, %v1421
        %v1423 = vsel %vm1222, %v1316, -inf
        %v1424 = vsel %vm1222, %v1318, -inf
        %v1425 = vmax.f32 %v1423, %v1424
        %v1426 = vrot.slane %v1425, 4
        %v1427 = vmax.f32 %v1425, %v1426
        %v1428 = vrot.slane %v1427, 2
        %v1429 = vmax.f32 %v1427, %v1428
        %v1430 = vrot.slane %v1429, 1
        %v1431 = vmax.f32 %v1429, %v1430
        %v1432 = vsel %vm1222, %v1321, -inf
        %v1433 = vsel %vm1222, %v1323, -inf
        %v1434 = vmax.f32 %v1432, %v1433
        %v1435 = vrot.slane %v1434, 4
        %v1436 = vmax.f32 %v1434, %v1435
        %v1437 = vrot.slane %v1436, 2
        %v1438 = vmax.f32 %v1436, %v1437
        %v1439 = vrot.slane %v1438, 1
        %v1440 = vmax.f32 %v1438, %v1439
        %v1441 = vsel %vm1222, %v1326, -inf
        %v1442 = vsel %vm1222, %v1328, -inf
        %v1443 = vmax.f32 %v1441, %v1442
        %v1444 = vrot.slane %v1443, 4
        %v1445 = vmax.f32 %v1443, %v1444
        %v1446 = vrot.slane %v1445, 2
        %v1447 = vmax.f32 %v1445, %v1446
        %v1448 = vrot.slane %v1447, 1
        %v1449 = vmax.f32 %v1447, %v1448
        %v1450 = vsel %vm1222, %v1331, -inf
        %v1451 = vsel %vm1222, %v1333, -inf
        %v1452 = vmax.f32 %v1450, %v1451
        %v1453 = vrot.slane %v1452, 4
        %v1454 = vmax.f32 %v1452, %v1453
        %v1455 = vrot.slane %v1454, 2
        %v1456 = vmax.f32 %v1454, %v1455
        %v1457 = vrot.slane %v1456, 1
        %v1458 = vmax.f32 %v1456, %v1457
        %v1459 = vsel %vm1222, %v1336, -inf
        %v1460 = vsel %vm1222, %v1338, -inf
        %v1461 = vmax.f32 %v1459, %v1460
        %v1462 = vrot.slane %v1461, 4
        %v1463 = vmax.f32 %v1461, %v1462
        %v1464 = vrot.slane %v1463, 2
        %v1465 = vmax.f32 %v1463, %v1464
        %v1466 = vrot.slane %v1465, 1
        %v1467 = vmax.f32 %v1465, %v1466
        %v1468 = vsel %vm1222, %v1341, -inf
        %v1469 = vsel %vm1222, %v1343, -inf
        %v1470 = vmax.f32 %v1468, %v1469
        %v1471 = vrot.slane %v1470, 4
        %v1472 = vmax.f32 %v1470, %v1471
        %v1473 = vrot.slane %v1472, 2
        %v1474 = vmax.f32 %v1472, %v1473
        %v1475 = vrot.slane %v1474, 1
        %v1476 = vmax.f32 %v1474, %v1475
        %v1477 = vsel %vm1222, %v1346, -inf
        %v1478 = vsel %vm1222, %v1348, -inf
        %v1479 = vmax.f32 %v1477, %v1478
        %v1480 = vrot.slane %v1479, 4
        %v1481 = vmax.f32 %v1479, %v1480
        %v1482 = vrot.slane %v1481, 2
        %v1483 = vmax.f32 %v1481, %v1482
        %v1484 = vrot.slane %v1483, 1
        %v1485 = vmax.f32 %v1483, %v1484
        %v1486 = vsel %vm1222, %v1351, -inf
        %v1487 = vsel %vm1222, %v1353, -inf
        %v1488 = vmax.f32 %v1486, %v1487
        %v1489 = vrot.slane %v1488, 4
        %v1490 = vmax.f32 %v1488, %v1489
        %v1491 = vrot.slane %v1490, 2
        %v1492 = vmax.f32 %v1490, %v1491
        %v1493 = vrot.slane %v1492, 1
        %v1494 = vmax.f32 %v1492, %v1493
        %v1495 = vsel %vm1222, %v1356, -inf
        %v1496 = vsel %vm1222, %v1358, -inf
        %v1497 = vmax.f32 %v1495, %v1496
        %v1498 = vrot.slane %v1497, 4
        %v1499 = vmax.f32 %v1497, %v1498
        %v1500 = vrot.slane %v1499, 2
        %v1501 = vmax.f32 %v1499, %v1500
        %v1502 = vrot.slane %v1501, 1
        %v1503 = vmax.f32 %v1501, %v1502
        %vm1504 = vcmp.gt.f32.partialorder %v1368, -1e+20
        %vm1505 = vcmp.gt.f32.partialorder %v1377, -1e+20
        %vm1506 = vcmp.gt.f32.partialorder %v1386, -1e+20
        %vm1507 = vcmp.gt.f32.partialorder %v1395, -1e+20
        %vm1508 = vcmp.gt.f32.partialorder %v1404, -1e+20
        %vm1509 = vcmp.gt.f32.partialorder %v1413, -1e+20
        %vm1510 = vcmp.gt.f32.partialorder %v1422, -1e+20
        %vm1511 = vcmp.gt.f32.partialorder %v1431, -1e+20
        %vm1512 = vcmp.gt.f32.partialorder %v1440, -1e+20
        %vm1513 = vcmp.gt.f32.partialorder %v1449, -1e+20
        %vm1514 = vcmp.gt.f32.partialorder %v1458, -1e+20
        %vm1515 = vcmp.gt.f32.partialorder %v1467, -1e+20
        %vm1516 = vcmp.gt.f32.partialorder %v1476, -1e+20
        %vm1517 = vcmp.gt.f32.partialorder %v1485, -1e+20
        %vm1518 = vcmp.gt.f32.partialorder %v1494, -1e+20
        %vm1519 = vcmp.gt.f32.partialorder %v1503, -1e+20
        %v1520 = vperm.slane %v244, 2
        %v1521 = vadd.f32 %v1368, %v1520
        %v1522 = vadd.f32 %v1377, %v1520
        %v1523 = vadd.f32 %v1386, %v1520
        %v1524 = vadd.f32 %v1395, %v1520
        %v1525 = vadd.f32 %v1404, %v1520
        %v1526 = vadd.f32 %v1413, %v1520
        %v1527 = vadd.f32 %v1422, %v1520
        %v1528 = vadd.f32 %v1431, %v1520
        %v1529 = vadd.f32 %v1440, %v1520
        %v1530 = vadd.f32 %v1449, %v1520
        %v1531 = vadd.f32 %v1458, %v1520
        %v1532 = vadd.f32 %v1467, %v1520
        %v1533 = vadd.f32 %v1476, %v1520
        %v1534 = vadd.f32 %v1485, %v1520
        %v1535 = vadd.f32 %v1494, %v1520
        %v1536 = vadd.f32 %v1503, %v1520
        %v1537 = vsel %vm1504, %v1521, 0.0
        %v1538 = vsel %vm1505, %v1522, 0.0
        %v1539 = vsel %vm1506, %v1523, 0.0
        %v1540 = vsel %vm1507, %v1524, 0.0
        %v1541 = vsel %vm1508, %v1525, 0.0
        %v1542 = vsel %vm1509, %v1526, 0.0
        %v1543 = vsel %vm1510, %v1527, 0.0
        %v1544 = vsel %vm1511, %v1528, 0.0
        %v1545 = vsel %vm1512, %v1529, 0.0
        %v1546 = vsel %vm1513, %v1530, 0.0
        %v1547 = vsel %vm1514, %v1531, 0.0
        %v1548 = vsel %vm1515, %v1532, 0.0
        %v1549 = vsel %vm1516, %v1533, 0.0
        %v1550 = vsel %vm1517, %v1534, 0.0
        %v1551 = vsel %vm1518, %v1535, 0.0
        %v1552 = vsel %vm1519, %v1536, 0.0
        %v1553 = vperm.slane %v244, 3
        %v1554 = vmul.f32 %v1537, %v1553
        %v1555 = vmul.f32 %v1538, %v1553
        %v1556 = vmul.f32 %v1539, %v1553
        %v1557 = vmul.f32 %v1540, %v1553
        %v1558 = vmul.f32 %v1541, %v1553
        %v1559 = vmul.f32 %v1542, %v1553
        %v1560 = vmul.f32 %v1543, %v1553
        %v1561 = vmul.f32 %v1544, %v1553
        %v1562 = vmul.f32 %v1545, %v1553
        %v1563 = vmul.f32 %v1546, %v1553
        %v1564 = vmul.f32 %v1547, %v1553
        %v1565 = vmul.f32 %v1548, %v1553
        %v1566 = vmul.f32 %v1549, %v1553
        %v1567 = vmul.f32 %v1550, %v1553
        %v1568 = vmul.f32 %v1551, %v1553
        %v1569 = vmul.f32 %v1552, %v1553
        %v1570 = vperm.slane %v244, 4
        %v1571 = vadd.f32 %v1554, %v1570
        %v1572 = vadd.f32 %v1555, %v1570
        %v1573 = vadd.f32 %v1556, %v1570
        %v1574 = vadd.f32 %v1557, %v1570
        %v1575 = vadd.f32 %v1558, %v1570
        %v1576 = vadd.f32 %v1559, %v1570
        %v1577 = vadd.f32 %v1560, %v1570
        %v1578 = vadd.f32 %v1561, %v1570
        %v1579 = vadd.f32 %v1562, %v1570
        %v1580 = vadd.f32 %v1563, %v1570
        %v1581 = vadd.f32 %v1564, %v1570
        %v1582 = vadd.f32 %v1565, %v1570
        %v1583 = vadd.f32 %v1566, %v1570
        %v1584 = vadd.f32 %v1567, %v1570
        %v1585 = vadd.f32 %v1568, %v1570
        %v1586 = vadd.f32 %v1569, %v1570
        %v1587 = vmax.f32 %v1571, 0.0
        %v1588 = vmax.f32 %v1572, 0.0
        %v1589 = vmax.f32 %v1573, 0.0
        %v1590 = vmax.f32 %v1574, 0.0
        %v1591 = vmax.f32 %v1575, 0.0
        %v1592 = vmax.f32 %v1576, 0.0
        %v1593 = vmax.f32 %v1577, 0.0
        %v1594 = vmax.f32 %v1578, 0.0
        %v1595 = vmax.f32 %v1579, 0.0
        %v1596 = vmax.f32 %v1580, 0.0
        %v1597 = vmax.f32 %v1581, 0.0
        %v1598 = vmax.f32 %v1582, 0.0
        %v1599 = vmax.f32 %v1583, 0.0
        %v1600 = vmax.f32 %v1584, 0.0
        %v1601 = vmax.f32 %v1585, 0.0
        %v1602 = vmax.f32 %v1586, 0.0
        %v1603 = vmul.f32 %v1587, %v767
        %v1604 = vmul.f32 %v1588, %v767
        %v1605 = vmul.f32 %v1589, %v767
        %v1606 = vmul.f32 %v1590, %v767
        %v1607 = vmul.f32 %v1591, %v767
        %v1608 = vmul.f32 %v1592, %v767
        %v1609 = vmul.f32 %v1593, %v767
        %v1610 = vmul.f32 %v1594, %v767
        %v1611 = vmul.f32 %v1595, %v767
        %v1612 = vmul.f32 %v1596, %v767
        %v1613 = vmul.f32 %v1597, %v767
        %v1614 = vmul.f32 %v1598, %v767
        %v1615 = vmul.f32 %v1599, %v767
        %v1616 = vmul.f32 %v1600, %v767
        %v1617 = vmul.f32 %v1601, %v767
        %v1618 = vmul.f32 %v1602, %v767
        %v1619 = vmul.f32 %v1587, %v928
        %v1620 = vmul.f32 %v1588, %v928
        %v1621 = vmul.f32 %v1589, %v928
        %v1622 = vmul.f32 %v1590, %v928
        %v1623 = vmul.f32 %v1591, %v928
        %v1624 = vmul.f32 %v1592, %v928
        %v1625 = vmul.f32 %v1593, %v928
        %v1626 = vmul.f32 %v1594, %v928
        %v1627 = vmul.f32 %v1595, %v928
        %v1628 = vmul.f32 %v1596, %v928
        %v1629 = vmul.f32 %v1597, %v928
        %v1630 = vmul.f32 %v1598, %v928
        %v1631 = vmul.f32 %v1599, %v928
        %v1632 = vmul.f32 %v1600, %v928
        %v1633 = vmul.f32 %v1601, %v928
        %v1634 = vmul.f32 %v1602, %v928
        %v1635 = vmul.f32 %v1587, %v1121
        %v1636 = vmul.f32 %v1588, %v1121
        %v1637 = vmul.f32 %v1589, %v1121
        %v1638 = vmul.f32 %v1590, %v1121
        %v1639 = vmul.f32 %v1591, %v1121
        %v1640 = vmul.f32 %v1592, %v1121
        %v1641 = vmul.f32 %v1593, %v1121
        %v1642 = vmul.f32 %v1594, %v1121
        %v1643 = vmul.f32 %v1595, %v1121
        %v1644 = vmul.f32 %v1596, %v1121
        %v1645 = vmul.f32 %v1597, %v1121
        %v1646 = vmul.f32 %v1598, %v1121
        %v1647 = vmul.f32 %v1599, %v1121
        %v1648 = vmul.f32 %v1600, %v1121
        %v1649 = vmul.f32 %v1601, %v1121
        %v1650 = vmul.f32 %v1602, %v1121
        %v1667 = vrot.slane %v1604, 7
        %vm1668 = vcmask 1041409
        %v1669 = vsel %vm1668, %v1667, %v1603
        %v1670 = vrot.slane %v1605, 6
        %vm1671 = vcmask 1042434
        %v1672 = vsel %vm1671, %v1670, %v1669
        %v1673 = vrot.slane %v1606, 5
        %vm1674 = vcmask 1043459
        %v1675 = vsel %vm1674, %v1673, %v1672
        %v1676 = vrot.slane %v1607, 4
        %vm1677 = vcmask 1044484
        %v1678 = vsel %vm1677, %v1676, %v1675
        %v1679 = vrot.slane %v1608, 3
        %vm1680 = vcmask 1045509
        %v1681 = vsel %vm1680, %v1679, %v1678
        %v1682 = vrot.slane %v1609, 2
        %vm1683 = vcmask 1046534
        %v1684 = vsel %vm1683, %v1682, %v1681
        %v1685 = vrot.slane %v1610, 1
        %vm1686 = vcmask 1047559
        %v1687 = vsel %vm1686, %v1685, %v1684
        %v1688 = vrot.slane %v1612, 7
        %v1689 = vsel %vm1668, %v1688, %v1611
        %v1690 = vrot.slane %v1613, 6
        %v1691 = vsel %vm1671, %v1690, %v1689
        %v1692 = vrot.slane %v1614, 5
        %v1693 = vsel %vm1674, %v1692, %v1691
        %v1694 = vrot.slane %v1615, 4
        %v1695 = vsel %vm1677, %v1694, %v1693
        %v1696 = vrot.slane %v1616, 3
        %v1697 = vsel %vm1680, %v1696, %v1695
        %v1698 = vrot.slane %v1617, 2
        %v1699 = vsel %vm1683, %v1698, %v1697
        %v1700 = vrot.slane %v1618, 1
        %v1701 = vsel %vm1686, %v1700, %v1699
        %v1720 = vrot.slane %v1620, 7
        %v1721 = vsel %vm1668, %v1720, %v1619
        %v1722 = vrot.slane %v1621, 6
        %v1723 = vsel %vm1671, %v1722, %v1721
        %v1724 = vrot.slane %v1622, 5
        %v1725 = vsel %vm1674, %v1724, %v1723
        %v1726 = vrot.slane %v1623, 4
        %v1727 = vsel %vm1677, %v1726, %v1725
        %v1728 = vrot.slane %v1624, 3
        %v1729 = vsel %vm1680, %v1728, %v1727
        %v1730 = vrot.slane %v1625, 2
        %v1731 = vsel %vm1683, %v1730, %v1729
        %v1732 = vrot.slane %v1626, 1
        %v1733 = vsel %vm1686, %v1732, %v1731
        %v1734 = vrot.slane %v1628, 7
        %v1735 = vsel %vm1668, %v1734, %v1627
        %v1736 = vrot.slane %v1629, 6
        %v1737 = vsel %vm1671, %v1736, %v1735
        %v1738 = vrot.slane %v1630, 5
        %v1739 = vsel %vm1674, %v1738, %v1737
        %v1740 = vrot.slane %v1631, 4
        %v1741 = vsel %vm1677, %v1740, %v1739
        %v1742 = vrot.slane %v1632, 3
        %v1743 = vsel %vm1680, %v1742, %v1741
        %v1744 = vrot.slane %v1633, 2
        %v1745 = vsel %vm1683, %v1744, %v1743
        %v1746 = vrot.slane %v1634, 1
        %v1747 = vsel %vm1686, %v1746, %v1745
        %v1766 = vrot.slane %v1636, 7
        %v1767 = vsel %vm1668, %v1766, %v1635
        %v1768 = vrot.slane %v1637, 6
        %v1769 = vsel %vm1671, %v1768, %v1767
        %v1770 = vrot.slane %v1638, 5
        %v1771 = vsel %vm1674, %v1770, %v1769
        %v1772 = vrot.slane %v1639, 4
        %v1773 = vsel %vm1677, %v1772, %v1771
        %v1774 = vrot.slane %v1640, 3
        %v1775 = vsel %vm1680, %v1774, %v1773
        %v1776 = vrot.slane %v1641, 2
        %v1777 = vsel %vm1683, %v1776, %v1775
        %v1778 = vrot.slane %v1642, 1
        %v1779 = vsel %vm1686, %v1778, %v1777
        %v1780 = vrot.slane %v1644, 7
        %v1781 = vsel %vm1668, %v1780, %v1643
        %v1782 = vrot.slane %v1645, 6
        %v1783 = vsel %vm1671, %v1782, %v1781
        %v1784 = vrot.slane %v1646, 5
        %v1785 = vsel %vm1674, %v1784, %v1783
        %v1786 = vrot.slane %v1647, 4
        %v1787 = vsel %vm1677, %v1786, %v1785
        %v1788 = vrot.slane %v1648, 3
        %v1789 = vsel %vm1680, %v1788, %v1787
        %v1790 = vrot.slane %v1649, 2
        %v1791 = vsel %vm1683, %v1790, %v1789
        %v1792 = vrot.slane %v1650, 1
        %v1793 = vsel %vm1686, %v1792, %v1791
        %v1796 = vpack.c.bf16 %v1701, %v1687
        %v1797 = vpack.c.bf16 %v1747, %v1733
        %v1798 = vpack.c.bf16 %v1793, %v1779
        %v1800 = vsel %vm373, %v320, 0
        %1802 = vmatpush.bf16.msra.mxu0 0
        %1803 = vmatpush.bf16.msra.mxu0 0
        %1804 = vmatpush.bf16.msra.mxu0 0
        %1805 = vmatpush.bf16.msra.mxu0 0
        %1806 = vmatpush.bf16.msra.mxu0 0
        %1807 = vmatpush.bf16.msra.mxu0 %v1798
        %1808 = vmatpush.bf16.msra.mxu0 %v1797
        %1809 = vmatpush.bf16.msra.mxu0 %v1796
        %1810 = vmatmul.bf16.gmra.mxu0 %v1800
        %v1811 = vpop.f32.mrf.mxu0
        %v1812 = vadd.f32 0.0, %v1811
        %v1813 = vpop.f32.mrf.mxu0
        %v1814 = vadd.f32 0.0, %v1813
        %1815 = vdwg.mxu0
        %v1832 = vrot.slane %v1588, 7
        %v1833 = vsel %vm1668, %v1832, %v1587
        %v1834 = vrot.slane %v1589, 6
        %v1835 = vsel %vm1671, %v1834, %v1833
        %v1836 = vrot.slane %v1590, 5
        %v1837 = vsel %vm1674, %v1836, %v1835
        %v1838 = vrot.slane %v1591, 4
        %v1839 = vsel %vm1677, %v1838, %v1837
        %v1840 = vrot.slane %v1592, 3
        %v1841 = vsel %vm1680, %v1840, %v1839
        %v1842 = vrot.slane %v1593, 2
        %v1843 = vsel %vm1683, %v1842, %v1841
        %v1844 = vrot.slane %v1594, 1
        %v1845 = vsel %vm1686, %v1844, %v1843
        %v1846 = vrot.slane %v1596, 7
        %v1847 = vsel %vm1668, %v1846, %v1595
        %v1848 = vrot.slane %v1597, 6
        %v1849 = vsel %vm1671, %v1848, %v1847
        %v1850 = vrot.slane %v1598, 5
        %v1851 = vsel %vm1674, %v1850, %v1849
        %v1852 = vrot.slane %v1599, 4
        %v1853 = vsel %vm1677, %v1852, %v1851
        %v1854 = vrot.slane %v1600, 3
        %v1855 = vsel %vm1680, %v1854, %v1853
        %v1856 = vrot.slane %v1601, 2
        %v1857 = vsel %vm1683, %v1856, %v1855
        %v1858 = vrot.slane %v1602, 1
        %v1859 = vsel %vm1686, %v1858, %v1857
        %1860 = vrot.lane.b32.xlu0 %v1845, 96
        %v1861 = vpop.permute.xlu0 %1860
        %1862 = vrot.lane.b32.xlu0 %v1859, 96
        %v1863 = vpop.permute.xlu0 %1862
        %v1866 = vsel %vm1222, %v1812, %v1861
        %v1867 = vsel %vm1222, %v1814, %v1863
        %v1868 = vpack.c.bf16 %v1867, %v1866
        %v1869 = vpack.c.bf16 %v1863, %v1861
        %v1870 = vperm.slane %v244, 5
        %v1895 = vunpack.c.l.b16 %v268
        %v1896 = vunpack.c.l.b16 %v269
        %v1897 = vunpack.c.l.b16 %v270
        %v1898 = vunpack.c.l.b16 %v271
        %v1899 = vunpack.c.l.b16 %v272
        %v1900 = vunpack.c.l.b16 %v273
        %v1901 = vunpack.c.l.b16 %v274
        %v1902 = vunpack.c.l.b16 %v275
        %v1903 = vunpack.c.l.b16 %v276
        %v1904 = vunpack.c.l.b16 %v277
        %v1905 = vunpack.c.l.b16 %v278
        %v1906 = vunpack.c.l.b16 %v279
        %v1907 = vunpack.c.l.b16 %v280
        %v1908 = vunpack.c.l.b16 %v281
        %v1909 = vunpack.c.l.b16 %v282
        %v1910 = vunpack.c.l.b16 %v283
        %v1911 = vunpack.c.l.b16 %v284
        %v1912 = vunpack.c.l.b16 %v285
        %v1913 = vunpack.c.l.b16 %v286
        %v1914 = vunpack.c.l.b16 %v287
        %v1915 = vunpack.c.l.b16 %v288
        %v1916 = vunpack.c.l.b16 %v289
        %v1917 = vunpack.c.l.b16 %v290
        %v1918 = vunpack.c.l.b16 %v291
        %v1919 = vpack.c.b16 %v1896, %v1895
        %v1920 = vpack.c.b16 %v1898, %v1897
        %v1921 = vpack.c.b16 %v1900, %v1899
        %v1922 = vpack.c.b16 %v1902, %v1901
        %v1923 = vpack.c.b16 %v1904, %v1903
        %v1924 = vpack.c.b16 %v1906, %v1905
        %v1925 = vpack.c.b16 %v1908, %v1907
        %v1926 = vpack.c.b16 %v1910, %v1909
        %v1927 = vpack.c.b16 %v1912, %v1911
        %v1928 = vpack.c.b16 %v1914, %v1913
        %v1929 = vpack.c.b16 %v1916, %v1915
        %v1930 = vpack.c.b16 %v1918, %v1917
        %vm1943 = vcmask 523264
        %v1945 = vsel %vm1943, %v1869, 0
        %1947 = vmatpush.bf16.msra.mxu0 %v1926
        %1948 = vmatpush.bf16.msra.mxu0 %v1925
        %1949 = vmatpush.bf16.msra.mxu0 %v1924
        %1950 = vmatpush.bf16.msra.mxu0 %v1923
        %1951 = vmatpush.bf16.msra.mxu0 %v1922
        %1952 = vmatpush.bf16.msra.mxu0 %v1921
        %1953 = vmatpush.bf16.msra.mxu0 %v1920
        %1954 = vmatpush.bf16.msra.mxu0 %v1919
        %1955 = vmatmul.bf16.gmra.mxu0 %v1868
        %v1956 = vpop.f32.mrf.mxu0
        %v1957 = vadd.f32 %v1870, %v1956
        %v1958 = vpop.f32.mrf.mxu0
        %v1959 = vadd.f32 %v1870, %v1958
        %1960 = vdwg.mxu0
        %1961 = vmatpush.bf16.msra.mxu0 0
        %1962 = vmatpush.bf16.msra.mxu0 0
        %1963 = vmatpush.bf16.msra.mxu0 0
        %1964 = vmatpush.bf16.msra.mxu0 0
        %1965 = vmatpush.bf16.msra.mxu0 %v1930
        %1966 = vmatpush.bf16.msra.mxu0 %v1929
        %1967 = vmatpush.bf16.msra.mxu0 %v1928
        %1968 = vmatpush.bf16.msra.mxu0 %v1927
        %1969 = vmatmul.bf16.gmra.mxu0 %v1945
        %v1970 = vpop.f32.mrf.mxu0
        %v1971 = vadd.f32 %v1957, %v1970
        %v1972 = vpop.f32.mrf.mxu0
        %v1973 = vadd.f32 %v1959, %v1972
        %1974 = vdwg.mxu0
        %v1975 = vmax.f32 %v1971, 0.0
        %v1976 = vmax.f32 %v1973, 0.0
        %v1977 = vmul.f32 %v1975, %v767
        %v1978 = vmul.f32 %v1976, %v767
        %v1979 = vmul.f32 %v1975, %v928
        %v1980 = vmul.f32 %v1976, %v928
        %v1981 = vmul.f32 %v1975, %v1121
        %v1982 = vmul.f32 %v1976, %v1121
        %v1983 = vpack.c.bf16 %v1978, %v1977
        %v1984 = vpack.c.bf16 %v1980, %v1979
        %v1985 = vpack.c.bf16 %v1982, %v1981
        %1986 = vmatpush.bf16.msra.mxu0 0
        %1987 = vmatpush.bf16.msra.mxu0 0
        %1988 = vmatpush.bf16.msra.mxu0 0
        %1989 = vmatpush.bf16.msra.mxu0 0
        %1990 = vmatpush.bf16.msra.mxu0 0
        %1991 = vmatpush.bf16.msra.mxu0 %v1985
        %1992 = vmatpush.bf16.msra.mxu0 %v1984
        %1993 = vmatpush.bf16.msra.mxu0 %v1983
        %1994 = vmatmul.bf16.gmra.mxu0 %v1800
        %v1995 = vpop.f32.mrf.mxu0
        %v1996 = vadd.f32 0.0, %v1995
        %v1997 = vpop.f32.mrf.mxu0
        %v1998 = vadd.f32 0.0, %v1997
        %1999 = vdwg.mxu0
        %2002 = vrot.lane.b32.xlu0 %v1975, 96
        %v2003 = vpop.permute.xlu0 %2002
        %2004 = vrot.lane.b32.xlu0 %v1976, 96
        %v2005 = vpop.permute.xlu0 %2004
        %v2008 = vsel %vm1222, %v1996, %v2003
        %v2009 = vsel %vm1222, %v1998, %v2005
        %v2010 = vpack.c.bf16 %v2009, %v2008
        %v2011 = vpack.c.bf16 %v2005, %v2003
        %v2012 = vperm.slane %v244, 6
        %v2037 = vunpack.c.l.b16 %v292
        %v2038 = vunpack.c.l.b16 %v293
        %v2039 = vunpack.c.l.b16 %v294
        %v2040 = vunpack.c.l.b16 %v295
        %v2041 = vunpack.c.l.b16 %v296
        %v2042 = vunpack.c.l.b16 %v297
        %v2043 = vunpack.c.l.b16 %v298
        %v2044 = vunpack.c.l.b16 %v299
        %v2045 = vunpack.c.l.b16 %v300
        %v2046 = vunpack.c.l.b16 %v301
        %v2047 = vunpack.c.l.b16 %v302
        %v2048 = vunpack.c.l.b16 %v303
        %v2049 = vunpack.c.l.b16 %v304
        %v2050 = vunpack.c.l.b16 %v305
        %v2051 = vunpack.c.l.b16 %v306
        %v2052 = vunpack.c.l.b16 %v307
        %v2053 = vunpack.c.l.b16 %v308
        %v2054 = vunpack.c.l.b16 %v309
        %v2055 = vunpack.c.l.b16 %v310
        %v2056 = vunpack.c.l.b16 %v311
        %v2057 = vunpack.c.l.b16 %v312
        %v2058 = vunpack.c.l.b16 %v313
        %v2059 = vunpack.c.l.b16 %v314
        %v2060 = vunpack.c.l.b16 %v315
        %v2061 = vpack.c.b16 %v2038, %v2037
        %v2062 = vpack.c.b16 %v2040, %v2039
        %v2063 = vpack.c.b16 %v2042, %v2041
        %v2064 = vpack.c.b16 %v2044, %v2043
        %v2065 = vpack.c.b16 %v2046, %v2045
        %v2066 = vpack.c.b16 %v2048, %v2047
        %v2067 = vpack.c.b16 %v2050, %v2049
        %v2068 = vpack.c.b16 %v2052, %v2051
        %v2069 = vpack.c.b16 %v2054, %v2053
        %v2070 = vpack.c.b16 %v2056, %v2055
        %v2071 = vpack.c.b16 %v2058, %v2057
        %v2072 = vpack.c.b16 %v2060, %v2059
        %v2086 = vsel %vm1943, %v2011, 0
        %2088 = vmatpush.bf16.msra.mxu0 %v2068
        %2089 = vmatpush.bf16.msra.mxu0 %v2067
        %2090 = vmatpush.bf16.msra.mxu0 %v2066
        %2091 = vmatpush.bf16.msra.mxu0 %v2065
        %2092 = vmatpush.bf16.msra.mxu0 %v2064
        %2093 = vmatpush.bf16.msra.mxu0 %v2063
        %2094 = vmatpush.bf16.msra.mxu0 %v2062
        %2095 = vmatpush.bf16.msra.mxu0 %v2061
        %2096 = vmatmul.bf16.gmra.mxu0 %v2010
        %v2097 = vpop.f32.mrf.mxu0
        %v2098 = vadd.f32 %v2012, %v2097
        %v2099 = vpop.f32.mrf.mxu0
        %v2100 = vadd.f32 %v2012, %v2099
        %2101 = vdwg.mxu0
        %2102 = vmatpush.bf16.msra.mxu0 0
        %2103 = vmatpush.bf16.msra.mxu0 0
        %2104 = vmatpush.bf16.msra.mxu0 0
        %2105 = vmatpush.bf16.msra.mxu0 0
        %2106 = vmatpush.bf16.msra.mxu0 %v2072
        %2107 = vmatpush.bf16.msra.mxu0 %v2071
        %2108 = vmatpush.bf16.msra.mxu0 %v2070
        %2109 = vmatpush.bf16.msra.mxu0 %v2069
        %2110 = vmatmul.bf16.gmra.mxu0 %v2086
        %v2111 = vpop.f32.mrf.mxu0
        %v2112 = vadd.f32 %v2098, %v2111
        %v2113 = vpop.f32.mrf.mxu0
        %v2114 = vadd.f32 %v2100, %v2113
        %2115 = vdwg.mxu0
        %vm2116 = vcmask 130048
        %2117 = vst.msk [vmem:[%s232] sm:$0xff] %vm2116, %v2112
        %2118 = vst.msk [vmem:[%s232 + $0x8] sm:$0xff] %vm2116, %v2114
        %s2119 = sand.u32 %s142, 1
        %s2120 = scalar_lea.sflag [#allocation3], %s2119
        %s2121 = sand.u32 %s142, 1
        %s2122 = smul.addr %s2121, 16
        %s2123 = scalar_lea.vmem [#allocation2], %s2122
        // Predicated region
        $region41: #{tpu_custom_call.1} parent=39 // pred_check
          %p2124 = pneg %p152
        $region42: #{tpu_custom_call.1} parent=39 // pred_check_branch
          %2126 = sbr.rel (%p2124) target = $region44
        $region43: #{tpu_custom_call.1} parent=39 // pred_region
          %2128 = vsyncadd %s2120, 0
          %s2129 = smul.addr %s19, 2
          %s2130 = smul.addr %s2129, 8
          %s2131 = scalar_lea.hbm %s5, %s2130
          %s2132 = sshll.u32 %s2123, 4
          %s2133 = int_to_ptr.vmem [resolvable:$true] %s2132
          %s2134 = sshll.u32 %s2131, 4
          %s2135 = int_to_ptr.hbm [resolvable:$true] %s2134
          %2140 = dma.vmem_to_hbm [thread:$0]  %s2133, 256, %s2135, %s2120, 128, 128, 8
        $region44: #{tpu_custom_call.1} parent=39 // pred_fallthru
          _
      $region40: #{tpu_custom_call.1} parent=5 // pred_fallthru
        _
      %p2141 = scmp.le.s32.totalorder 2, %s14
      // Predicated region
      $region45: #{tpu_custom_call.1} parent=5 // pred_check
        %p2142 = pneg %p2141
      $region46: #{tpu_custom_call.1} parent=5 // pred_check_branch
        %2144 = sbr.rel (%p2142) target = $region48
      $region47: #{tpu_custom_call.1} parent=5 // pred_region
        %s2145 = ssub.s32 %s14, 2
        // Predicated region
        $region49: #{tpu_custom_call.1} parent=47 // pred_check
          %p2146 = pneg %p158
        $region50: #{tpu_custom_call.1} parent=47 // pred_check_branch
          %2148 = sbr.rel (%p2146) target = $region52
        $region51: #{tpu_custom_call.1} parent=47 // pred_region
          %s2149 = sand.u32 %s143, 1
          %s2150 = scalar_lea.sflag [#allocation3], %s2149
          %s2151 = sand.u32 %s143, 1
          %s2152 = smul.addr %s2151, 16
          %s2153 = scalar_lea.vmem [#allocation2], %s2152
          %2155 = dma.done %s2150, 256
        $region52: #{tpu_custom_call.1} parent=47 // pred_fallthru
          _
      $region48: #{tpu_custom_call.1} parent=5 // pred_fallthru
        _
    $region6: #{tpu_custom_call.1} parent=1 // loop_footer
      %s18 = sadd.s32 1, %s14
    $region7: #{tpu_custom_call.1} parent=1 // loop_footer_branch
      %13 = sbr.rel target = $region3
    $region8: #{tpu_custom_call.1} parent=1 // loop_exit
      _
    %2156 = vsyncpa [#allocation3], 1
    %s2157 = scalar_lea.sflag [#allocation3], 1
    %2158 = vsyncpa %s2157, 1

</llo_original>
